<compile_context>
chip_gen: v5e
topology: v5e:2x2
jax: 0.10.0
libtpu: 0.0.40
codegen_flags: <defaults>
</compile_context>

<pallas_src>
import functools
import math

import numpy as np
import jax
import jax.numpy as jnp
from jax.experimental import pallas as pl
from jax.experimental.pallas import tpu as pltpu


# ----------------------------------------------------------------------------------
# Offline derivation of the fused linear pipeline (pure numpy, float64, import time)
# ----------------------------------------------------------------------------------
def _np_upfirdn2d(x, kernel, up=1, down=1, pad=(0, 0)):
    if len(pad) == 2:
        pad = (pad[0], pad[1], pad[0], pad[1])
    px0, px1, py0, py1 = pad
    n, c, h, w = x.shape
    kh, kw = kernel.shape
    u = np.zeros((n, c, h * up, w * up), x.dtype)
    u[:, :, ::up, ::up] = x
    u = np.pad(u, ((0, 0), (0, 0), (py0, py1), (px0, px1)))
    kf = np.asarray(kernel, x.dtype)[::-1, ::-1]
    oh = h * up + py0 + py1 - kh + 1
    ow = w * up + px0 + px1 - kw + 1
    out = np.zeros((n, c, oh, ow), x.dtype)
    for a in range(kh):
        for b in range(kw):
            out += kf[a, b] * u[:, :, a:a + oh, b:b + ow]
    return out[:, :, ::down, ::down]


def _haar_kernels():
    a = 1.0 / np.sqrt(2.0)
    l = np.array([[a, a]])
    h = np.array([[-a, a]])
    return l.T @ l, h.T @ l, l.T @ h, h.T @ h


def _np_iwt_blur_dwt(x):
    """x: (N, 12, H, W) float64 -> Haar(blur_down2(InverseHaar(x))): (N, 12, H//2, W//2)."""
    ll, lh, hl, hh = _haar_kernels()
    xll, xlh, xhl, xhh = np.split(x, 4, axis=1)
    y = (_np_upfirdn2d(xll, ll, up=2, pad=(1, 0, 1, 0))
         + _np_upfirdn2d(xlh, -lh, up=2, pad=(1, 0, 1, 0))
         + _np_upfirdn2d(xhl, -hl, up=2, pad=(1, 0, 1, 0))
         + _np_upfirdn2d(xhh, hh, up=2, pad=(1, 0, 1, 0)))
    k4 = np.outer([1.0, 3.0, 3.0, 1.0], [1.0, 3.0, 3.0, 1.0])
    k4 = k4 / k4.sum()
    d = _np_upfirdn2d(y, k4, down=2, pad=(1, 1))
    return np.concatenate([_np_upfirdn2d(d, kk, down=2) for kk in (ll, lh, hl, hh)], axis=1)


@functools.lru_cache(maxsize=None)
def _tap_matrices():
    """(9, 48, 12) float32: A[a*3+b] maps xp[u+a-1, v+b-1, :48] -> dwt[u, v, :12]."""
    hh0 = 5
    x0 = np.zeros((48, 12, 2 * hh0, 2 * hh0), np.float64)
    for k in range(48):
        rp, cp, c = k // 24, (k // 12) % 2, k % 12
        x0[k, c, 2 * 2 + rp, 2 * 2 + cp] = 1.0          # impulse at half-res cell (2, 2)
    resp = _np_iwt_blur_dwt(x0)                         # (48, 12, 5, 5)
    far = np.ones((hh0, hh0), bool)
    far[1:4, 1:4] = False
    assert np.abs(resp[:, :, far]).max() < 1e-10        # the composed support really is 3x3
    a_taps = np.empty((3, 3, 48, 12), np.float64)
    for a in range(3):
        for b in range(3):
            a_taps[a, b] = resp[:, :, 3 - a, 3 - b]
    return a_taps.reshape(9, 48, 12).astype(np.float32)


# ----------------------------------------------------------------------------------
# Pallas kernel
# ----------------------------------------------------------------------------------
def _from_rgb_kernel(x_ref, halo_ref, b9_ref, bias_ref, dwt_ref, out_ref, buf_ref,
                     *, precision):
    # x_ref   : (1, 48, M)        tile rows [t*TH-1, t*TH+TH-1) of the padded image,
    #                             channel-major, spatial flat with row pitch Wp
    # halo_ref: (1, 1, 48, 2*Wp)  the two following padded rows (bottom halo)
    # b9_ref  : (9, 12+Cout, 48)  fused tap matrices, flipped for (Nout,48)@(48,M)
    # bias_ref: (Cout, 1)
    # dwt_ref : (1, 12,   M)      channel-major, lane-dense
    # out_ref : (1, Cout, M)
    # buf_ref : (48, M + 3*Wp)    assembled contiguous working buffer (VMEM scratch)
    m = x_ref.shape[2]
    wp = halo_ref.shape[3] // 2
    n_dwt = dwt_ref.shape[1]

    b9 = b9_ref[...]                  # (9, 12+Cout, 48) tiny, hoisted constant load
    bias = bias_ref[...]              # (Cout, 1)

    # Assemble the working buffer with two 128-lane-aligned VMEM copies plus a
    # small zero guard row (only ever read by discarded junk output columns).
    buf_ref[:, 0:m] = x_ref[0]
    buf_ref[:, m:m + 2 * wp] = halo_ref[0, 0]
    buf_ref[:, m + 2 * wp:m + 3 * wp] = jnp.zeros((48, wp), dtype=buf_ref.dtype)

    # Nine conv taps = nine contiguous lane-slices of the Ref -> one matmul each.
    acc = jnp.zeros((b9.shape[1], m), jnp.float32)
    for a in range(3):
        for b in range(3):
            off = a * wp + b
            acc = acc + jnp.dot(b9[3 * a + b], buf_ref[:, off:off + m],
                                precision=precision,
                                preferred_element_type=jnp.float32)

    dwt_ref[0] = acc[:n_dwt]
    z = acc[n_dwt:] + bias
    out_ref[0] = jnp.where(z >= 0.0, z, 0.2 * z) * np.float32(np.sqrt(2.0))


# ----------------------------------------------------------------------------------
# Tiling helpers (VMEM-budget aware, padded byte sizes, hardened)
# ----------------------------------------------------------------------------------
_DEFAULT_VMEM_BUDGET = 24 * 1024 * 1024      # per-step working-set target
_VMEM_LIMIT_BYTES = 48 * 1024 * 1024         # scoped limit: safe on v5e/v6e/v7x


def _padded_width(wh, th):
    """Smallest Wp >= Wh+2 such that TH*Wp is a multiple of 128 (lane-aligned blocks)."""
    g = 128 // math.gcd(th, 128)
    return ((wh + 2 + g - 1) // g) * g


def _vmem_estimate_bytes(th, wp, cout, in_itemsize):
    m = th * wp
    n_out = 12 + cout
    est = 0
    est += 2 * 48 * m * in_itemsize            # main input block (double buffered)
    est += 2 * 48 * 2 * wp * in_itemsize       # halo block (double buffered)
    est += 48 * (th + 3) * wp * in_itemsize    # assembled scratch buffer
    est += 48 * m * in_itemsize                # transient copy of the main block value
    est += 48 * m * in_itemsize                # one live shifted matmul operand
    est += 2 * 12 * m * 4 + 2 * cout * m * 4   # output blocks (f32, double buffered)
    est += 2 * n_out * m * 4                   # accumulator + one dot partial
    est += 9 * n_out * 48 * in_itemsize + cout * 4
    return est + (1 << 16)


def _pick_tile(hh, wh, cout, in_itemsize, vmem_budget):
    for th in sorted((d for d in range(1, hh + 1) if hh % d == 0), reverse=True):
        wp = _padded_width(wh, th)
        if _vmem_estimate_bytes(th, wp, cout, in_itemsize) <= vmem_budget:
            return th, wp
    raise ValueError(
        f"ModulatedFromRGB Pallas kernel: no row tile of Hh={hh}, Wh={wh} fits the "
        f"{vmem_budget}-byte VMEM budget (image too wide); reduce the image width.")


# ----------------------------------------------------------------------------------
# Wrapper
# ----------------------------------------------------------------------------------
def modulated_from_rgb(x, conv_weight, conv_bias, skip=None, tile_rows=None,
                       compute_dtype=jnp.bfloat16, vmem_budget=_DEFAULT_VMEM_BUDGET):
    """ModulatedFromRGB(out_channel, downsample=True).forward(x, skip) -> (input_dwt, out).

    x: (N, 12, H, W).  conv_weight: (Cout, 12, 1, 1).  conv_bias: (Cout,).
    Returns NCHW float32 tensors: dwt (N, 12, H/2, W/2), out (N, Cout, H/2, W/2).

    compute_dtype: bf16 (default, single-pass MXU) or f32 (strict-numerics mode,
    Precision.HIGHEST; used only for validation).
    """
    cdt = np.dtype(compute_dtype)
    isz = cdt.itemsize
    use_highest = cdt == np.dtype(np.float32)
    precision = jax.lax.Precision.HIGHEST if use_highest else None

    x = x.astype(jnp.float32)                            # convert_input_fp32=True
    nb, c, h, w = x.shape
    assert c == 12 and h % 2 == 0 and w % 2 == 0
    hh, wh = h // 2, w // 2
    cout = int(conv_weight.shape[0])

    if tile_rows is None:
        th, wp = _pick_tile(hh, wh, cout, isz, vmem_budget)
    else:
        th = int(tile_rows)
        if hh % th != 0:
            raise ValueError(f"tile_rows={th} must divide Hh={hh}")
        wp = _padded_width(wh, th)
        if _vmem_estimate_bytes(th, wp, cout, isz) > _VMEM_LIMIT_BYTES:
            raise ValueError(f"tile_rows={th} blows the VMEM limit for Wh={wh}")
    nt = hh // th
    m = th * wp

    # Fused, flipped tap matrices: per tap, rows = [dwt (12) | dwt @ scaled 1x1 conv (Cout)].
    a9 = jnp.asarray(_tap_matrices())                                          # (9, 48, 12)
    w_sc = (conv_weight.reshape(cout, 12).astype(jnp.float32).T
            * np.float32(1.0 / np.sqrt(12.0)))                                 # (12, Cout)
    b_full = jnp.concatenate([a9, jnp.einsum('tki,io->tko', a9, w_sc)], axis=-1)
    b9t = jnp.transpose(b_full, (0, 2, 1)).astype(cdt)                         # (9, 12+Cout, 48)
    bias = conv_bias.reshape(cout, 1).astype(jnp.float32)

    # Half-res polyphase, channel-major, padded spatially:
    #   rows: 1 zero row on top and bottom; cols: 1 zero left halo + zeros up to pitch Wp.
    xp = x.reshape(nb, 12, hh, 2, wh, 2).transpose(0, 3, 5, 1, 2, 4).reshape(nb, 48, hh, wh)
    xpad = jnp.pad(xp.astype(cdt), ((0, 0), (0, 0), (1, 1), (1, wp - wh - 1)))  # (N,48,Hh+2,Wp)
    x_flat = xpad.reshape(nb, 48, (hh + 2) * wp)

    # Tiny halo side-input: for tile t the two padded rows (t+1)*th, (t+1)*th+1
    # (its last owned row + the row below / zero at the image bottom).
    hidx = (np.arange(1, nt + 1)[:, None] * th + np.arange(2)[None, :]).reshape(-1)
    halo = xpad[:, :, hidx, :].reshape(nb, 48, nt, 2 * wp).transpose(0, 2, 1, 3)  # (N,nT,48,2Wp)

    kernel = functools.partial(_from_rgb_kernel, precision=precision)

    dwt_flat, out_flat = pl.pallas_call(
        kernel,
        grid=(nb, nt),
        in_specs=[
            pl.BlockSpec((1, 48, m), lambda i, t: (i, 0, t)),
            pl.BlockSpec((1, 1, 48, 2 * wp), lambda i, t: (i, t, 0, 0)),
            pl.BlockSpec((9, 12 + cout, 48), lambda i, t: (0, 0, 0)),
            pl.BlockSpec((cout, 1), lambda i, t: (0, 0)),
        ],
        out_specs=[
            pl.BlockSpec((1, 12, m), lambda i, t: (i, 0, t)),
            pl.BlockSpec((1, cout, m), lambda i, t: (i, 0, t)),
        ],
        out_shape=(
            jax.ShapeDtypeStruct((nb, 12, hh * wp), jnp.float32),
            jax.ShapeDtypeStruct((nb, cout, hh * wp), jnp.float32),
        ),
        scratch_shapes=[pltpu.VMEM((48, (th + 3) * wp), cdt)],
        compiler_params=pltpu.CompilerParams(
            dimension_semantics=("parallel", "parallel"),
            vmem_limit_bytes=_VMEM_LIMIT_BYTES,
        ),
    )(x_flat, halo, b9t, bias)

    # Drop the (small) zero-pad columns; everything else is free metadata reshape.
    dwt = dwt_flat.reshape(nb, 12, hh, wp)[..., :wh]
    out = out_flat.reshape(nb, cout, hh, wp)[..., :wh]
    if skip is not None:
        out = out + skip
    return dwt, out


# ----------------------------------------------------------------------------------
# float64 numpy reference (upfirdn2d semantics) for validation
# ----------------------------------------------------------------------------------
def _reference_forward_np(x, conv_weight, conv_bias):
    x64 = np.asarray(x, np.float64)
    dwt = _np_iwt_blur_dwt(x64)
    cout = conv_weight.shape[0]
    w_sc = np.asarray(conv_weight, np.float64).reshape(cout, 12) / np.sqrt(12.0)
    z = (np.einsum('oc,nchw->nohw', w_sc, dwt)
         + np.asarray(conv_bias, np.float64).reshape(1, cout, 1, 1))
    out = np.where(z >= 0.0, z, 0.2 * z) * np.sqrt(2.0)
    return dwt, out


if __name__ == "__main__":
    key = jax.random.PRNGKey(0)
    kx1, kx2, kw, kb, ks = jax.random.split(key, 5)

    out_channel = 8
    conv_weight = jax.random.normal(kw, (out_channel, 12, 1, 1), dtype=jnp.float32)
    conv_bias = 0.1 * jax.random.normal(kb, (out_channel,), dtype=jnp.float32)

    # Config 1: production path (bf16 MXU matmuls), tiled rows (Hh=16 -> 2 tiles of 8)
    # exercising the halo path.  Tolerance is the bf16-operand rounding envelope.
    x1 = jax.random.normal(kx1, (2, 12, 32, 32), dtype=jnp.float32)
    r_dwt1, r_out1 = _reference_forward_np(x1, conv_weight, conv_bias)
    dwt1, out1 = modulated_from_rgb(x1, conv_weight, conv_bias, tile_rows=8)
    jax.block_until_ready((dwt1, out1))
    np.testing.assert_allclose(np.asarray(dwt1), r_dwt1, rtol=3e-2, atol=3e-2)
    np.testing.assert_allclose(np.asarray(out1), r_out1, rtol=3e-2, atol=3e-2)

    # Config 2: same tiling but strict-numerics mode (f32 operands, HIGHEST) - validates
    # the polyphase / halo / flat-tap indexing at tight tolerance.
    dwt1f, out1f = modulated_from_rgb(x1, conv_weight, conv_bias, tile_rows=8,
                                      compute_dtype=jnp.float32)
    jax.block_until_ready((dwt1f, out1f))
    np.testing.assert_allclose(np.asarray(dwt1f), r_dwt1, rtol=1e-3, atol=1e-3)
    np.testing.assert_allclose(np.asarray(out1f), r_out1, rtol=1e-3, atol=1e-3)

    # Config 3: default (budget-driven) tile selection, single tile per image, with a
    # non-zero skip connection, production bf16 path.
    x2 = jax.random.normal(kx2, (2, 12, 16, 16), dtype=jnp.float32)
    skip = 0.5 * jax.random.normal(ks, (2, out_channel, 8, 8), dtype=jnp.float32)
    r_dwt2, r_out2 = _reference_forward_np(x2, conv_weight, conv_bias)
    r_out2 = r_out2 + np.asarray(skip, np.float64)
    dwt2, out2 = modulated_from_rgb(x2, conv_weight, conv_bias, skip=skip)
    jax.block_until_ready((dwt2, out2))
    np.testing.assert_allclose(np.asarray(dwt2), r_dwt2, rtol=3e-2, atol=3e-2)
    np.testing.assert_allclose(np.asarray(out2), r_out2, rtol=3e-2, atol=3e-2)

    print("KERNEL_OK")
</pallas_src>

<mosaic_0001>
module attributes {stable_mosaic.version = 11 : i64} {
  func.func @_from_rgb_kernel(%arg0: i32, %arg1: i32, %arg2: memref<1x48x256xbf16, #tpu.memory_space<vmem>>, %arg3: memref<1x1x48x64xbf16, #tpu.memory_space<vmem>>, %arg4: memref<9x20x48xbf16, #tpu.memory_space<vmem>>, %arg5: memref<8x1xf32, #tpu.memory_space<vmem>>, %arg6: memref<1x12x256xf32, #tpu.memory_space<vmem>>, %arg7: memref<1x8x256xf32, #tpu.memory_space<vmem>>, %arg8: memref<48x352xbf16, #tpu.memory_space<vmem>>) attributes {dimension_semantics = [#tpu.dimension_semantics<parallel>, #tpu.dimension_semantics<parallel>], iteration_bounds = array<i64: 2, 2>, scalar_prefetch = 0 : i64, scratch_operands = 1 : i64, tpu.core_type = #tpu.core_type<tc>, window_params = [{transform_indices = @transform_0, window_bounds = array<i64: 1, 48, 256>}, {transform_indices = @transform_1, window_bounds = array<i64: 1, 1, 48, 64>}, {pipeline_mode = #tpu.pipeline_mode<synchronous>, transform_indices = @transform_2, window_bounds = array<i64: 9, 20, 48>}, {pipeline_mode = #tpu.pipeline_mode<synchronous>, transform_indices = @transform_3, window_bounds = array<i64: 8, 1>}, {transform_indices = @transform_4, window_bounds = array<i64: 1, 12, 256>}, {transform_indices = @transform_5, window_bounds = array<i64: 1, 8, 256>}]} {
    %c0 = arith.constant 0 : index
    %c0_0 = arith.constant 0 : index
    %c0_1 = arith.constant 0 : index
    %0 = vector.load %arg4[%c0, %c0_0, %c0_1] : memref<9x20x48xbf16, #tpu.memory_space<vmem>>, vector<9x20x48xbf16>
    %c0_2 = arith.constant 0 : index
    %c0_3 = arith.constant 0 : index
    %1 = vector.load %arg5[%c0_2, %c0_3] : memref<8x1xf32, #tpu.memory_space<vmem>>, vector<8x1xf32>
    %c0_4 = arith.constant 0 : index
    %c0_5 = arith.constant 0 : index
    %c0_6 = arith.constant 0 : index
    %2 = vector.load %arg2[%c0_4, %c0_5, %c0_6] : memref<1x48x256xbf16, #tpu.memory_space<vmem>>, vector<1x48x256xbf16>
    %3 = vector.shape_cast %2 : vector<1x48x256xbf16> to vector<48x256xbf16>
    %c0_7 = arith.constant 0 : index
    %c0_8 = arith.constant 0 : index
    %4 = vector.load %arg8[%c0_7, %c0_8] : memref<48x352xbf16, #tpu.memory_space<vmem>>, vector<48x256xbf16>
    tpu.vector_store %arg8[%c0_7, %c0_8], %3 {strides = array<i32>} : memref<48x352xbf16, #tpu.memory_space<vmem>>, vector<48x256xbf16>,
    %c0_9 = arith.constant 0 : index
    %c0_10 = arith.constant 0 : index
    %c0_11 = arith.constant 0 : index
    %c0_12 = arith.constant 0 : index
    %5 = vector.load %arg3[%c0_9, %c0_10, %c0_11, %c0_12] : memref<1x1x48x64xbf16, #tpu.memory_space<vmem>>, vector<1x1x48x64xbf16>
    %6 = vector.shape_cast %5 : vector<1x1x48x64xbf16> to vector<48x64xbf16>
    %c0_13 = arith.constant 0 : index
    %c256 = arith.constant 256 : index
    %7 = vector.load %arg8[%c0_13, %c256] : memref<48x352xbf16, #tpu.memory_space<vmem>>, vector<48x64xbf16>
    tpu.vector_store %arg8[%c0_13, %c256], %6 {strides = array<i32>} : memref<48x352xbf16, #tpu.memory_space<vmem>>, vector<48x64xbf16>,
    %cst = arith.constant 0.000000e+00 : bf16
    %8 = vector.broadcast %cst : bf16 to vector<48x32xbf16>
    %c0_14 = arith.constant 0 : index
    %c320 = arith.constant 320 : index
    %9 = vector.load %arg8[%c0_14, %c320] : memref<48x352xbf16, #tpu.memory_space<vmem>>, vector<48x32xbf16>
    tpu.vector_store %arg8[%c0_14, %c320], %8 {strides = array<i32>} : memref<48x352xbf16, #tpu.memory_space<vmem>>, vector<48x32xbf16>,
    %cst_15 = arith.constant 0.000000e+00 : f32
    %10 = vector.broadcast %cst_15 : f32 to vector<20x256xf32>
    %11 = vector.extract_strided_slice %0 {offsets = [0, 0, 0], sizes = [1, 20, 48], strides = [1, 1, 1]} : vector<9x20x48xbf16> to vector<1x20x48xbf16>
    %12 = vector.shape_cast %11 : vector<1x20x48xbf16> to vector<20x48xbf16>
    %c0_16 = arith.constant 0 : index
    %c0_17 = arith.constant 0 : index
    %13 = vector.load %arg8[%c0_16, %c0_17] : memref<48x352xbf16, #tpu.memory_space<vmem>>, vector<48x256xbf16>
    %cst_18 = arith.constant dense<0.000000e+00> : vector<20x256xf32>
    %14 = tpu.matmul %12, %13, %cst_18 {dimension_numbers = #tpu.dot_dimension_numbers<[1], [0], [0], [1], [0, 0, 1, 1], [], []>} : vector<20x48xbf16>, vector<48x256xbf16>, vector<20x256xf32> -> vector<20x256xf32>
    %15 = arith.addf %10, %14 : vector<20x256xf32>
    %16 = vector.extract_strided_slice %0 {offsets = [1, 0, 0], sizes = [1, 20, 48], strides = [1, 1, 1]} : vector<9x20x48xbf16> to vector<1x20x48xbf16>
    %17 = vector.shape_cast %16 : vector<1x20x48xbf16> to vector<20x48xbf16>
    %c0_19 = arith.constant 0 : index
    %c1 = arith.constant 1 : index
    %18 = vector.load %arg8[%c0_19, %c1] : memref<48x352xbf16, #tpu.memory_space<vmem>>, vector<48x256xbf16>
    %cst_20 = arith.constant dense<0.000000e+00> : vector<20x256xf32>
    %19 = tpu.matmul %17, %18, %cst_20 {dimension_numbers = #tpu.dot_dimension_numbers<[1], [0], [0], [1], [0, 0, 1, 1], [], []>} : vector<20x48xbf16>, vector<48x256xbf16>, vector<20x256xf32> -> vector<20x256xf32>
    %20 = arith.addf %15, %19 : vector<20x256xf32>
    %21 = vector.extract_strided_slice %0 {offsets = [2, 0, 0], sizes = [1, 20, 48], strides = [1, 1, 1]} : vector<9x20x48xbf16> to vector<1x20x48xbf16>
    %22 = vector.shape_cast %21 : vector<1x20x48xbf16> to vector<20x48xbf16>
    %c0_21 = arith.constant 0 : index
    %c2 = arith.constant 2 : index
    %23 = vector.load %arg8[%c0_21, %c2] : memref<48x352xbf16, #tpu.memory_space<vmem>>, vector<48x256xbf16>
    %cst_22 = arith.constant dense<0.000000e+00> : vector<20x256xf32>
    %24 = tpu.matmul %22, %23, %cst_22 {dimension_numbers = #tpu.dot_dimension_numbers<[1], [0], [0], [1], [0, 0, 1, 1], [], []>} : vector<20x48xbf16>, vector<48x256xbf16>, vector<20x256xf32> -> vector<20x256xf32>
    %25 = arith.addf %20, %24 : vector<20x256xf32>
    %26 = vector.extract_strided_slice %0 {offsets = [3, 0, 0], sizes = [1, 20, 48], strides = [1, 1, 1]} : vector<9x20x48xbf16> to vector<1x20x48xbf16>
    %27 = vector.shape_cast %26 : vector<1x20x48xbf16> to vector<20x48xbf16>
    %c0_23 = arith.constant 0 : index
    %c32 = arith.constant 32 : index
    %28 = vector.load %arg8[%c0_23, %c32] : memref<48x352xbf16, #tpu.memory_space<vmem>>, vector<48x256xbf16>
    %cst_24 = arith.constant dense<0.000000e+00> : vector<20x256xf32>
    %29 = tpu.matmul %27, %28, %cst_24 {dimension_numbers = #tpu.dot_dimension_numbers<[1], [0], [0], [1], [0, 0, 1, 1], [], []>} : vector<20x48xbf16>, vector<48x256xbf16>, vector<20x256xf32> -> vector<20x256xf32>
    %30 = arith.addf %25, %29 : vector<20x256xf32>
    %31 = vector.extract_strided_slice %0 {offsets = [4, 0, 0], sizes = [1, 20, 48], strides = [1, 1, 1]} : vector<9x20x48xbf16> to vector<1x20x48xbf16>
    %32 = vector.shape_cast %31 : vector<1x20x48xbf16> to vector<20x48xbf16>
    %c0_25 = arith.constant 0 : index
    %c33 = arith.constant 33 : index
    %33 = vector.load %arg8[%c0_25, %c33] : memref<48x352xbf16, #tpu.memory_space<vmem>>, vector<48x256xbf16>
    %cst_26 = arith.constant dense<0.000000e+00> : vector<20x256xf32>
    %34 = tpu.matmul %32, %33, %cst_26 {dimension_numbers = #tpu.dot_dimension_numbers<[1], [0], [0], [1], [0, 0, 1, 1], [], []>} : vector<20x48xbf16>, vector<48x256xbf16>, vector<20x256xf32> -> vector<20x256xf32>
    %35 = arith.addf %30, %34 : vector<20x256xf32>
    %36 = vector.extract_strided_slice %0 {offsets = [5, 0, 0], sizes = [1, 20, 48], strides = [1, 1, 1]} : vector<9x20x48xbf16> to vector<1x20x48xbf16>
    %37 = vector.shape_cast %36 : vector<1x20x48xbf16> to vector<20x48xbf16>
    %c0_27 = arith.constant 0 : index
    %c34 = arith.constant 34 : index
    %38 = vector.load %arg8[%c0_27, %c34] : memref<48x352xbf16, #tpu.memory_space<vmem>>, vector<48x256xbf16>
    %cst_28 = arith.constant dense<0.000000e+00> : vector<20x256xf32>
    %39 = tpu.matmul %37, %38, %cst_28 {dimension_numbers = #tpu.dot_dimension_numbers<[1], [0], [0], [1], [0, 0, 1, 1], [], []>} : vector<20x48xbf16>, vector<48x256xbf16>, vector<20x256xf32> -> vector<20x256xf32>
    %40 = arith.addf %35, %39 : vector<20x256xf32>
    %41 = vector.extract_strided_slice %0 {offsets = [6, 0, 0], sizes = [1, 20, 48], strides = [1, 1, 1]} : vector<9x20x48xbf16> to vector<1x20x48xbf16>
    %42 = vector.shape_cast %41 : vector<1x20x48xbf16> to vector<20x48xbf16>
    %c0_29 = arith.constant 0 : index
    %c64 = arith.constant 64 : index
    %43 = vector.load %arg8[%c0_29, %c64] : memref<48x352xbf16, #tpu.memory_space<vmem>>, vector<48x256xbf16>
    %cst_30 = arith.constant dense<0.000000e+00> : vector<20x256xf32>
    %44 = tpu.matmul %42, %43, %cst_30 {dimension_numbers = #tpu.dot_dimension_numbers<[1], [0], [0], [1], [0, 0, 1, 1], [], []>} : vector<20x48xbf16>, vector<48x256xbf16>, vector<20x256xf32> -> vector<20x256xf32>
    %45 = arith.addf %40, %44 : vector<20x256xf32>
    %46 = vector.extract_strided_slice %0 {offsets = [7, 0, 0], sizes = [1, 20, 48], strides = [1, 1, 1]} : vector<9x20x48xbf16> to vector<1x20x48xbf16>
    %47 = vector.shape_cast %46 : vector<1x20x48xbf16> to vector<20x48xbf16>
    %c0_31 = arith.constant 0 : index
    %c65 = arith.constant 65 : index
    %48 = vector.load %arg8[%c0_31, %c65] : memref<48x352xbf16, #tpu.memory_space<vmem>>, vector<48x256xbf16>
    %cst_32 = arith.constant dense<0.000000e+00> : vector<20x256xf32>
    %49 = tpu.matmul %47, %48, %cst_32 {dimension_numbers = #tpu.dot_dimension_numbers<[1], [0], [0], [1], [0, 0, 1, 1], [], []>} : vector<20x48xbf16>, vector<48x256xbf16>, vector<20x256xf32> -> vector<20x256xf32>
    %50 = arith.addf %45, %49 : vector<20x256xf32>
    %51 = vector.extract_strided_slice %0 {offsets = [8, 0, 0], sizes = [1, 20, 48], strides = [1, 1, 1]} : vector<9x20x48xbf16> to vector<1x20x48xbf16>
    %52 = vector.shape_cast %51 : vector<1x20x48xbf16> to vector<20x48xbf16>
    %c0_33 = arith.constant 0 : index
    %c66 = arith.constant 66 : index
    %53 = vector.load %arg8[%c0_33, %c66] : memref<48x352xbf16, #tpu.memory_space<vmem>>, vector<48x256xbf16>
    %cst_34 = arith.constant dense<0.000000e+00> : vector<20x256xf32>
    %54 = tpu.matmul %52, %53, %cst_34 {dimension_numbers = #tpu.dot_dimension_numbers<[1], [0], [0], [1], [0, 0, 1, 1], [], []>} : vector<20x48xbf16>, vector<48x256xbf16>, vector<20x256xf32> -> vector<20x256xf32>
    %55 = arith.addf %50, %54 : vector<20x256xf32>
    %56 = vector.extract_strided_slice %55 {offsets = [0, 0], sizes = [12, 256], strides = [1, 1]} : vector<20x256xf32> to vector<12x256xf32>
    %c0_35 = arith.constant 0 : index
    %c0_36 = arith.constant 0 : index
    %c0_37 = arith.constant 0 : index
    %57 = vector.load %arg6[%c0_35, %c0_36, %c0_37] : memref<1x12x256xf32, #tpu.memory_space<vmem>>, vector<1x12x256xf32>
    %58 = vector.shape_cast %57 : vector<1x12x256xf32> to vector<12x256xf32>
    %59 = vector.shape_cast %56 : vector<12x256xf32> to vector<1x12x256xf32>
    tpu.vector_store %arg6[%c0_35, %c0_36, %c0_37], %59 {strides = array<i32>} : memref<1x12x256xf32, #tpu.memory_space<vmem>>, vector<1x12x256xf32>,
    %60 = vector.extract_strided_slice %55 {offsets = [12, 0], sizes = [8, 256], strides = [1, 1]} : vector<20x256xf32> to vector<8x256xf32>
    %61 = vector.broadcast %1 : vector<8x1xf32> to vector<8x256xf32>
    %62 = arith.addf %60, %61 : vector<8x256xf32>
    %cst_38 = arith.constant 0.000000e+00 : f32
    %63 = vector.broadcast %cst_38 : f32 to vector<8x256xf32>
    %64 = arith.cmpf oge, %62, %63 : vector<8x256xf32>
    %cst_39 = arith.constant 2.000000e-01 : f32
    %65 = vector.broadcast %cst_39 : f32 to vector<8x256xf32>
    %66 = arith.mulf %65, %62 : vector<8x256xf32>
    %67 = arith.select %64, %62, %66 : vector<8x256xi1>, vector<8x256xf32>
    %cst_40 = arith.constant 1.41421354 : f32
    %68 = vector.broadcast %cst_40 : f32 to vector<8x256xf32>
    %69 = arith.mulf %67, %68 : vector<8x256xf32>
    %c0_41 = arith.constant 0 : index
    %c0_42 = arith.constant 0 : index
    %c0_43 = arith.constant 0 : index
    %70 = vector.load %arg7[%c0_41, %c0_42, %c0_43] : memref<1x8x256xf32, #tpu.memory_space<vmem>>, vector<1x8x256xf32>
    %71 = vector.shape_cast %70 : vector<1x8x256xf32> to vector<8x256xf32>
    %72 = vector.shape_cast %69 : vector<8x256xf32> to vector<1x8x256xf32>
    tpu.vector_store %arg7[%c0_41, %c0_42, %c0_43], %72 {strides = array<i32>} : memref<1x8x256xf32, #tpu.memory_space<vmem>>, vector<1x8x256xf32>,
    return
  }
  func.func @transform_0(%arg0: i32, %arg1: i32) -> (i32, i32, i32) {
    %c0_i32 = arith.constant 0 : i32
    %c0_i32_0 = arith.constant 0 : i32
    return %arg0, %c0_i32, %arg1 : i32, i32, i32
  }
  func.func @transform_1(%arg0: i32, %arg1: i32) -> (i32, i32, i32, i32) {
    %c0_i32 = arith.constant 0 : i32
    %c0_i32_0 = arith.constant 0 : i32
    %c0_i32_1 = arith.constant 0 : i32
    return %arg0, %arg1, %c0_i32, %c0_i32_0 : i32, i32, i32, i32
  }
  func.func @transform_2(%arg0: i32, %arg1: i32) -> (i32, i32, i32) {
    %c0_i32 = arith.constant 0 : i32
    %c0_i32_0 = arith.constant 0 : i32
    %c0_i32_1 = arith.constant 0 : i32
    %c0_i32_2 = arith.constant 0 : i32
    return %c0_i32, %c0_i32_0, %c0_i32_1 : i32, i32, i32
  }
  func.func @transform_3(%arg0: i32, %arg1: i32) -> (i32, i32) {
    %c0_i32 = arith.constant 0 : i32
    %c0_i32_0 = arith.constant 0 : i32
    %c0_i32_1 = arith.constant 0 : i32
    return %c0_i32, %c0_i32_0 : i32, i32
  }
  func.func @transform_4(%arg0: i32, %arg1: i32) -> (i32, i32, i32) {
    %c0_i32 = arith.constant 0 : i32
    %c0_i32_0 = arith.constant 0 : i32
    return %arg0, %c0_i32, %arg1 : i32, i32, i32
  }
  func.func @transform_5(%arg0: i32, %arg1: i32) -> (i32, i32, i32) {
    %c0_i32 = arith.constant 0 : i32
    %c0_i32_0 = arith.constant 0 : i32
    return %arg0, %c0_i32, %arg1 : i32, i32, i32
  }
}

</mosaic_0001>

<llo_original>
// kernel: tpu_custom_call.1
$region0: #{tpu_custom_call.1}
  #allocation0 [shape = 'u32[]', space=smem, size = 0x4, offset = 0x4, fixed_abs, tag = 'smem constant byte address 0x4 - core index']
  #allocation1 [shape = 'u32[72,128]{1,0:T(1,128)}', space=vmem, size = 0x9000, scoped, tag = 'internal scratch']
  #allocation2 [shape = 'bf16[48,352]{1,0:T(8,128)(2,1)}', space=vmem, size = 0x9000, scoped, tag = 'scratch operand']
  %s0 = inlined_call_operand.hbm [shape: bf16[2,48,576], index: 0, kind: input, shape index: {}]
  %s1 = inlined_call_operand.hbm [shape: bf16[2,2,48,64], index: 1, kind: input, shape index: {}]
  %s2 = inlined_call_operand.hbm [shape: bf16[9,20,48], index: 2, kind: input, shape index: {}]
  %s3 = inlined_call_operand.vmem [shape: f32[8,1], index: 3, kind: input, shape index: {}]
  %s4 = inlined_call_operand.vmem [shape: f32[2,12,512], index: 4, kind: output, shape index: {0}]
  %s5 = inlined_call_operand.hbm [shape: f32[2,8,512], index: 5, kind: output, shape index: {1}]
  %6 = xla_tuple %s4, %s5
  %s7 = sld [smem:[#allocation0]]
  $region88: #{tpu_custom_call.1} parent=0
    _
  %s9 = ssub.s32 1, %s7
  %s10 = scalar_select 0, %s9, %s7
  $region1: #{tpu_custom_call.1} parent=0
    #allocation3 [shape = 'u8[49152]{0}', space=vmem, size = 0xc000, scoped, tag = 'input window, operand 0']
    #allocation4 [shape = 's32[2]{0}', space=sflag, size = 0x8, scoped, tag = 'scoped memory for tpu_custom_call.1']
    #allocation5 [shape = 's32[2]{0}', space=sflag, size = 0x8, scoped, tag = 'scoped memory for tpu_custom_call.1']
    #allocation6 [shape = 'u8[24576]{0}', space=vmem, size = 0x6000, scoped, tag = 'input window, operand 1']
    #allocation7 [shape = 's32[2]{0}', space=sflag, size = 0x8, scoped, tag = 'scoped memory for tpu_custom_call.1']
    #allocation8 [shape = 'u8[55296]{0}', space=vmem, size = 0xd800, scoped, tag = 'input window, operand 2, single buffered']
    #allocation9 [shape = 'u8[32768]{0}', space=vmem, size = 0x8000, scoped, tag = 'output window, operand 0']
    #allocation10 [shape = 'u8[16384]{0}', space=vmem, size = 0x4000, scoped, tag = 'output window, operand 1']
    %11 = vsyncpa [#allocation4], 0
    %s12 = scalar_lea.sflag [#allocation4], 1
    %13 = vsyncpa %s12, 0
    %14 = vsyncpa [#allocation7], 0
    %s15 = scalar_lea.sflag [#allocation7], 1
    %16 = vsyncpa %s15, 0
    %17 = vsyncpa [#allocation5], 0
    %s18 = scalar_lea.sflag [#allocation5], 1
    %19 = vsyncpa %s18, 0
    loop: start=0, step=1, limit=6
    $region2: #{tpu_custom_call.1} parent=1 // loop_pre_header
      _
    $region3: #{tpu_custom_call.1} parent=1 // loop_header
      %s21 = sphi 0, %s25
      %p22 = scmp.ge.s32.totalorder %s21, 6
      %s28 = sphi 0, %s40
      %s29 = sphi 0, %s36
      %s30 = sphi 0, %s28
      %s31 = sphi 0, %s29
      %s32 = sphi 0, %s30
      %s33 = sphi 0, %s31
      %s45 = sphi 0, %s47
      %s48 = sphi 0, %s45
      %s49 = sphi 0, %s48
      %s65 = sphi 0, %s49
      %s73 = sphi 0, %s75
      %s76 = sphi 0, %s73
      %s77 = sphi 0, %s76
      %s93 = sphi 0, %s77
      %s97 = sphi 0, %s97
      %s99 = sphi 0, %s97
      %s100 = sphi 0, %s99
      %s114 = sphi 0, %s100
      %s118 = sphi 0, %s118
      %s120 = sphi 0, %s118
      %s121 = sphi 0, %s120
      %s135 = sphi 0, %s121
      %s143 = sphi 0, %s145
      %s146 = sphi 0, %s143
      %s147 = sphi 0, %s146
      %s163 = sphi 0, %s147
      %s171 = sphi 0, %s173
      %s174 = sphi 0, %s171
      %s175 = sphi 0, %s174
      %s191 = sphi 0, %s175
    $region4: #{tpu_custom_call.1} parent=1 // loop_header_branch
      %24 = sbr.rel (%p22) target = $region8
    $region5: #{tpu_custom_call.1} parent=1 // loop_body
      %s26 = ssub.s32 %s21, 1
      %s27 = ssub.s32 %s21, 2
      %s34 = sadd.s32 1, %s29
      %p35 = scmp.ge.s32.totalorder %s34, 2
      %s36 = scalar_select %p35, 0, %s34
      %s37 = sadd.s32 1, %s28
      %s38 = scalar_select %p35, %s37, %s28
      %p39 = scmp.ge.s32.totalorder %s38, 2
      %s40 = scalar_select %p39, 0, %s38
      %s41 = ssub.s32 %s28, %s40
      %s42 = ssub.s32 %s29, %s36
      %s43 = sor.u32 %s41, %s42
      %p44 = scmp.eq.s32.totalorder %s43, 0
      %s46 = sadd.s32 %s45, 1
      %s47 = scalar_select %p44, %s45, %s46
      %p50 = pneg %p44
      %p51 = scmp.eq.s32.totalorder %s21, 3
      %p52 = por %p50, %p51
      %p53 = scmp.ne.s32.totalorder %s45, %s48
      %p54 = scmp.eq.s32.totalorder %s21, 0
      %p55 = por %p53, %p54
      %p56 = scmp.ne.s32.totalorder %s45, %s48
      %p57 = scmp.eq.s32.totalorder %s26, 3
      %p58 = por %p56, %p57
      %p59 = scmp.ne.s32.totalorder %s48, %s49
      %p60 = scmp.eq.s32.totalorder %s26, 0
      %p61 = por %p59, %p60
      %p62 = scmp.ne.s32.totalorder %s48, %s49
      %p63 = scmp.eq.s32.totalorder %s27, 3
      %p64 = por %p62, %p63
      %p66 = scmp.ne.s32.totalorder %s49, %s65
      %p67 = scmp.eq.s32.totalorder %s27, 0
      %p68 = por %p66, %p67
      %s69 = ssub.s32 %s28, %s40
      %s70 = ssub.s32 %s29, %s36
      %s71 = sor.u32 %s69, %s70
      %p72 = scmp.eq.s32.totalorder %s71, 0
      %s74 = sadd.s32 %s73, 1
      %s75 = scalar_select %p72, %s73, %s74
      %p78 = pneg %p72
      %p79 = scmp.eq.s32.totalorder %s21, 3
      %p80 = por %p78, %p79
      %p81 = scmp.ne.s32.totalorder %s73, %s76
      %p82 = scmp.eq.s32.totalorder %s21, 0
      %p83 = por %p81, %p82
      %p84 = scmp.ne.s32.totalorder %s73, %s76
      %p85 = scmp.eq.s32.totalorder %s26, 3
      %p86 = por %p84, %p85
      %p87 = scmp.ne.s32.totalorder %s76, %s77
      %p88 = scmp.eq.s32.totalorder %s26, 0
      %p89 = por %p87, %p88
      %p90 = scmp.ne.s32.totalorder %s76, %s77
      %p91 = scmp.eq.s32.totalorder %s27, 3
      %p92 = por %p90, %p91
      %p94 = scmp.ne.s32.totalorder %s77, %s93
      %p95 = scmp.eq.s32.totalorder %s27, 0
      %p96 = por %p94, %p95
      %s98 = sadd.s32 %s97, 1
      %p101 = scmp.eq.s32.totalorder %s21, 3
      %p102 = scmp.ne.s32.totalorder %s97, %s99
      %p103 = scmp.eq.s32.totalorder %s21, 0
      %p104 = por %p102, %p103
      %p105 = scmp.ne.s32.totalorder %s97, %s99
      %p106 = scmp.eq.s32.totalorder %s26, 3
      %p107 = por %p105, %p106
      %p108 = scmp.ne.s32.totalorder %s99, %s100
      %p109 = scmp.eq.s32.totalorder %s26, 0
      %p110 = por %p108, %p109
      %p111 = scmp.ne.s32.totalorder %s99, %s100
      %p112 = scmp.eq.s32.totalorder %s27, 3
      %p113 = por %p111, %p112
      %p115 = scmp.ne.s32.totalorder %s100, %s114
      %p116 = scmp.eq.s32.totalorder %s27, 0
      %p117 = por %p115, %p116
      %s119 = sadd.s32 %s118, 1
      %p122 = scmp.eq.s32.totalorder %s21, 3
      %p123 = scmp.ne.s32.totalorder %s118, %s120
      %p124 = scmp.eq.s32.totalorder %s21, 0
      %p125 = por %p123, %p124
      %p126 = scmp.ne.s32.totalorder %s118, %s120
      %p127 = scmp.eq.s32.totalorder %s26, 3
      %p128 = por %p126, %p127
      %p129 = scmp.ne.s32.totalorder %s120, %s121
      %p130 = scmp.eq.s32.totalorder %s26, 0
      %p131 = por %p129, %p130
      %p132 = scmp.ne.s32.totalorder %s120, %s121
      %p133 = scmp.eq.s32.totalorder %s27, 3
      %p134 = por %p132, %p133
      %p136 = scmp.ne.s32.totalorder %s121, %s135
      %p137 = scmp.eq.s32.totalorder %s27, 0
      %p138 = por %p136, %p137
      %s139 = ssub.s32 %s28, %s40
      %s140 = ssub.s32 %s29, %s36
      %s141 = sor.u32 %s139, %s140
      %p142 = scmp.eq.s32.totalorder %s141, 0
      %s144 = sadd.s32 %s143, 1
      %s145 = scalar_select %p142, %s143, %s144
      %p148 = pneg %p142
      %p149 = scmp.eq.s32.totalorder %s21, 3
      %p150 = por %p148, %p149
      %p151 = scmp.ne.s32.totalorder %s143, %s146
      %p152 = scmp.eq.s32.totalorder %s21, 0
      %p153 = por %p151, %p152
      %p154 = scmp.ne.s32.totalorder %s143, %s146
      %p155 = scmp.eq.s32.totalorder %s26, 3
      %p156 = por %p154, %p155
      %p157 = scmp.ne.s32.totalorder %s146, %s147
      %p158 = scmp.eq.s32.totalorder %s26, 0
      %p159 = por %p157, %p158
      %p160 = scmp.ne.s32.totalorder %s146, %s147
      %p161 = scmp.eq.s32.totalorder %s27, 3
      %p162 = por %p160, %p161
      %p164 = scmp.ne.s32.totalorder %s147, %s163
      %p165 = scmp.eq.s32.totalorder %s27, 0
      %p166 = por %p164, %p165
      %s167 = ssub.s32 %s28, %s40
      %s168 = ssub.s32 %s29, %s36
      %s169 = sor.u32 %s167, %s168
      %p170 = scmp.eq.s32.totalorder %s169, 0
      %s172 = sadd.s32 %s171, 1
      %s173 = scalar_select %p170, %s171, %s172
      %p176 = pneg %p170
      %p177 = scmp.eq.s32.totalorder %s21, 3
      %p178 = por %p176, %p177
      %p179 = scmp.ne.s32.totalorder %s171, %s174
      %p180 = scmp.eq.s32.totalorder %s21, 0
      %p181 = por %p179, %p180
      %p182 = scmp.ne.s32.totalorder %s171, %s174
      %p183 = scmp.eq.s32.totalorder %s26, 3
      %p184 = por %p182, %p183
      %p185 = scmp.ne.s32.totalorder %s174, %s175
      %p186 = scmp.eq.s32.totalorder %s26, 0
      %p187 = por %p185, %p186
      %p188 = scmp.ne.s32.totalorder %s174, %s175
      %p189 = scmp.eq.s32.totalorder %s27, 3
      %p190 = por %p188, %p189
      %p192 = scmp.ne.s32.totalorder %s175, %s191
      %p193 = scmp.eq.s32.totalorder %s27, 0
      %p194 = por %p192, %p193
      %p195 = scmp.le.s32.totalorder 1, %s21
      %p196 = scmp.lt.s32.totalorder %s21, 5
      %p197 = pnand %p195, %p196
      %p198 = pneg %p197
      // Predicated region
      $region9: #{tpu_custom_call.1} parent=5 // pred_check
        _
      $region10: #{tpu_custom_call.1} parent=5 // pred_check_branch
        %200 = sbr.rel (%p197) target = $region12
      $region11: #{tpu_custom_call.1} parent=5 // pred_region
        %s201 = ssub.s32 %s21, 1
        // Predicated region
        $region13: #{tpu_custom_call.1} parent=11 // pred_check
          %p202 = pneg %p110
        $region14: #{tpu_custom_call.1} parent=11 // pred_check_branch
          %204 = sbr.rel (%p202) target = $region16
        $region15: #{tpu_custom_call.1} parent=11 // pred_region
          %206 = vsyncadd [#allocation7], 0
          %s207 = sshll.u32 %s2, 4
          %s208 = int_to_ptr.hbm [resolvable:$true] %s207
          %s209 = sshll.u32 [#allocation8], 4
          %s210 = int_to_ptr.vmem [resolvable:$true] %s209
          %215 = dma.hbm_to_vmem [thread:$0]  %s208, 1728, %s210, [#allocation7], 64, 64, 4
        $region16: #{tpu_custom_call.1} parent=11 // pred_fallthru
          _
        // Predicated region
        $region17: #{tpu_custom_call.1} parent=11 // pred_check
          %p216 = pneg %p131
        $region18: #{tpu_custom_call.1} parent=11 // pred_check_branch
          %218 = sbr.rel (%p216) target = $region20
        $region19: #{tpu_custom_call.1} parent=11 // pred_region
          _
        $region20: #{tpu_custom_call.1} parent=11 // pred_fallthru
          _
      $region12: #{tpu_custom_call.1} parent=5 // pred_fallthru
        _
      %p219 = scmp.lt.s32.totalorder %s21, 4
      // Predicated region
      $region21: #{tpu_custom_call.1} parent=5 // pred_check
        %p220 = pneg %p219
      $region22: #{tpu_custom_call.1} parent=5 // pred_check_branch
        %222 = sbr.rel (%p220) target = $region24
      $region23: #{tpu_custom_call.1} parent=5 // pred_region
        // Predicated region
        $region25: #{tpu_custom_call.1} parent=23 // pred_check
          %p223 = pneg %p55
        $region26: #{tpu_custom_call.1} parent=23 // pred_check_branch
          %225 = sbr.rel (%p223) target = $region28
        $region27: #{tpu_custom_call.1} parent=23 // pred_region
          %s226 = sand.u32 %s45, 1
          %s227 = scalar_lea.sflag [#allocation4], %s226
          %s228 = sand.u32 %s45, 1
          %s229 = smul.addr %s228, 48
          %s230 = scalar_lea.vmem [#allocation3], %s229
          %s231 = smul.u32 2, %s29
          %s232 = ssub.s32 5, %s231
          %p233 = scmp.lt.s32.totalorder %s232, 2
          %s234 = scalar_select %p233, %s232, 2
          %s235 = smul.u32 24, %s234
          %s236 = ssub.s32 48, %s235
          %s237 = sshll.u32 %s236, 4
          %238 = vsyncadd %s227, %s237
          %p239 = scmp.ne.s32.totalorder 0, %s235
          %s240 = smul.addr %s28, 30
          %s241 = sadd.s32 %s231, %s240
          %s242 = smul.addr %s241, 4
          %s243 = scalar_lea.hbm %s0, %s242
          %s244 = smul.u32 %s234, 4
          %s245 = smul.u32 %s244, 6
          %s246 = sshll.u32 %s243, 4
          %s247 = int_to_ptr.hbm [resolvable:$true] %s246
          %s248 = sshll.u32 %s230, 4
          %s249 = int_to_ptr.vmem [resolvable:$true] %s248
          %s250 = sshll.u32 %s245, 4
          %254 = dma.hbm_to_vmem [thread:$0]  (%p239), %s247, %s250, %s249, %s227, 320, 128, %s244
        $region28: #{tpu_custom_call.1} parent=23 // pred_fallthru
          _
        // Predicated region
        $region29: #{tpu_custom_call.1} parent=23 // pred_check
          %p255 = pneg %p83
        $region30: #{tpu_custom_call.1} parent=23 // pred_check_branch
          %257 = sbr.rel (%p255) target = $region32
        $region31: #{tpu_custom_call.1} parent=23 // pred_region
          %s258 = sand.u32 %s21, 1
          %s259 = scalar_lea.sflag [#allocation7], %s258
          %s260 = sand.u32 %s73, 1
          %s261 = smul.addr %s260, 24
          %s262 = scalar_lea.vmem [#allocation6], %s261
          %264 = vsyncadd %s259, 0
          %s265 = smul.addr %s29, 6
          %s266 = smul.addr %s28, 12
          %s267 = sadd.s32 %s265, %s266
          %s268 = smul.addr %s267, 4
          %s269 = scalar_lea.hbm %s1, %s268
          %s270 = sshll.u32 %s269, 4
          %s271 = int_to_ptr.hbm [resolvable:$true] %s270
          %s272 = sshll.u32 %s262, 4
          %s273 = int_to_ptr.vmem [resolvable:$true] %s272
          %278 = dma.hbm_to_vmem [thread:$0]  %s271, 384, %s273, %s259, 64, 64, 4
        $region32: #{tpu_custom_call.1} parent=23 // pred_fallthru
          _
      $region24: #{tpu_custom_call.1} parent=5 // pred_fallthru
        _
      %p279 = scmp.le.s32.totalorder 1, %s21
      %p280 = scmp.lt.s32.totalorder %s21, 5
      %p281 = pnand %p279, %p280
      %p282 = pneg %p281
      // Predicated region
      $region33: #{tpu_custom_call.1} parent=5 // pred_check
        _
      $region34: #{tpu_custom_call.1} parent=5 // pred_check_branch
        %284 = sbr.rel (%p281) target = $region36
      $region35: #{tpu_custom_call.1} parent=5 // pred_region
        %s285 = ssub.s32 %s21, 1
        %s286 = sand.u32 %s48, 1
        %s287 = scalar_lea.sflag [#allocation4], %s286
        %s288 = sand.u32 %s48, 1
        %s289 = smul.addr %s288, 48
        %s290 = scalar_lea.vmem [#allocation3], %s289
        // Predicated region
        $region37: #{tpu_custom_call.1} parent=35 // pred_check
          %p291 = pneg %p61
        $region38: #{tpu_custom_call.1} parent=35 // pred_check_branch
          %293 = sbr.rel (%p291) target = $region40
        $region39: #{tpu_custom_call.1} parent=35 // pred_region
          %295 = dma.done %s287, 768
        $region40: #{tpu_custom_call.1} parent=35 // pred_fallthru
          _
        %s296 = sand.u32 %s26, 1
        %s297 = scalar_lea.sflag [#allocation7], %s296
        %s298 = sand.u32 %s76, 1
        %s299 = smul.addr %s298, 24
        %s300 = scalar_lea.vmem [#allocation6], %s299
        // Predicated region
        $region41: #{tpu_custom_call.1} parent=35 // pred_check
          %p301 = pneg %p89
        $region42: #{tpu_custom_call.1} parent=35 // pred_check_branch
          %303 = sbr.rel (%p301) target = $region44
        $region43: #{tpu_custom_call.1} parent=35 // pred_region
          %305 = dma.done %s297, 384
        $region44: #{tpu_custom_call.1} parent=35 // pred_fallthru
          _
        // Predicated region
        $region45: #{tpu_custom_call.1} parent=35 // pred_check
          %p306 = pneg %p110
        $region46: #{tpu_custom_call.1} parent=35 // pred_check_branch
          %308 = sbr.rel (%p306) target = $region48
        $region47: #{tpu_custom_call.1} parent=35 // pred_region
          %310 = dma.done [#allocation7], 1728
        $region48: #{tpu_custom_call.1} parent=35 // pred_fallthru
          _
        %s311 = sand.u32 %s48, 1
        %s312 = scalar_lea.sflag [#allocation4], %s311
        %s313 = sand.u32 %s48, 1
        %s314 = smul.addr %s313, 48
        %s315 = scalar_lea.vmem [#allocation3], %s314
        %p316 = pneg %p61
        %p317 = pneg %p58
        %s318 = sand.u32 %s26, 1
        %s319 = scalar_lea.sflag [#allocation7], %s318
        %s320 = sand.u32 %s76, 1
        %s321 = smul.addr %s320, 24
        %s322 = scalar_lea.vmem [#allocation6], %s321
        %p323 = pneg %p89
        %p324 = pneg %p86
        %p325 = pneg %p110
        %p326 = pneg %p107
        %p327 = pneg %p131
        %p328 = pneg %p128
        %p329 = pneg %p159
        %p330 = pneg %p156
        %s331 = sand.u32 %s146, 1
        %s332 = sand.u32 %s146, 1
        %s333 = smul.addr %s332, 32
        %s334 = scalar_lea.vmem [#allocation9], %s333
        %p335 = pneg %p187
        %p336 = pneg %p184
        %s337 = sand.u32 %s174, 1
        %s338 = scalar_lea.sflag [#allocation5], %s337
        %s339 = sand.u32 %s174, 1
        %s340 = smul.addr %s339, 16
        %s341 = scalar_lea.vmem [#allocation10], %s340
        %s342 = smul.u32 2, %s31
        %s343 = ssub.s32 5, %s342
        %p344 = scmp.lt.s32.totalorder %s343, 2
        %s345 = scalar_select %p344, %s343, 2
        %s346 = smul.u32 24, %s345
        %s347 = smul.u32 2, %s31
        %s348 = smul.u32 2, %s31
        %v350 = vld [vmem:[#allocation8] sm:$0xf]
        %v351 = vld [vmem:[#allocation8 + $0x4] sm:$0xf]
        %v352 = vld [vmem:[#allocation8 + $0x8] sm:$0x3]
        %v353 = vld [vmem:[#allocation8 + $0xc] sm:$0xf]
        %v354 = vld [vmem:[#allocation8 + $0x10] sm:$0xf]
        %v355 = vld [vmem:[#allocation8 + $0x14] sm:$0x3]
        %v356 = vld [vmem:[#allocation8 + $0x18] sm:$0xf]
        %v357 = vld [vmem:[#allocation8 + $0x1c] sm:$0xf]
        %v358 = vld [vmem:[#allocation8 + $0x20] sm:$0x3]
        %v359 = vld [vmem:[#allocation8 + $0x24] sm:$0xf]
        %v360 = vld [vmem:[#allocation8 + $0x28] sm:$0xf]
        %v361 = vld [vmem:[#allocation8 + $0x2c] sm:$0x3]
        %v362 = vld [vmem:[#allocation8 + $0x30] sm:$0xf]
        %v363 = vld [vmem:[#allocation8 + $0x34] sm:$0xf]
        %v364 = vld [vmem:[#allocation8 + $0x38] sm:$0x3]
        %v365 = vld [vmem:[#allocation8 + $0x3c] sm:$0xf]
        %v366 = vld [vmem:[#allocation8 + $0x40] sm:$0xf]
        %v367 = vld [vmem:[#allocation8 + $0x44] sm:$0x3]
        %v368 = vld [vmem:[#allocation8 + $0x48] sm:$0xf]
        %v369 = vld [vmem:[#allocation8 + $0x4c] sm:$0xf]
        %v370 = vld [vmem:[#allocation8 + $0x50] sm:$0x3]
        %v371 = vld [vmem:[#allocation8 + $0x54] sm:$0xf]
        %v372 = vld [vmem:[#allocation8 + $0x58] sm:$0xf]
        %v373 = vld [vmem:[#allocation8 + $0x5c] sm:$0x3]
        %v374 = vld [vmem:[#allocation8 + $0x60] sm:$0xf]
        %v375 = vld [vmem:[#allocation8 + $0x64] sm:$0xf]
        %v376 = vld [vmem:[#allocation8 + $0x68] sm:$0x3]
        %v377 = vld [vmem:[%s3] sm:$0xff]
        %v378 = vld [vmem:[%s290] sm:$0xff]
        %v379 = vld [vmem:[%s290 + $0x8] sm:$0xff]
        %v380 = vld [vmem:[%s290 + $0x10] sm:$0xff]
        %v381 = vld [vmem:[%s290 + $0x18] sm:$0xff]
        %v382 = vld [vmem:[%s290 + $0x20] sm:$0xff]
        %v383 = vld [vmem:[%s290 + $0x28] sm:$0xff]
        %384 = vst [vmem:[#allocation2] sm:$0xff] %v378
        %385 = vst [vmem:[#allocation2 + $0xc] sm:$0xff] %v379
        %386 = vst [vmem:[#allocation2 + $0x18] sm:$0xff] %v380
        %387 = vst [vmem:[#allocation2 + $0x24] sm:$0xff] %v381
        %388 = vst [vmem:[#allocation2 + $0x30] sm:$0xff] %v382
        %389 = vst [vmem:[#allocation2 + $0x3c] sm:$0xff] %v383
        %v390 = vld [vmem:[%s300] sm:$0xf]
        %v391 = vld [vmem:[%s300 + $0x4] sm:$0xf]
        %v392 = vld [vmem:[%s300 + $0x8] sm:$0xf]
        %v393 = vld [vmem:[%s300 + $0xc] sm:$0xf]
        %v394 = vld [vmem:[%s300 + $0x10] sm:$0xf]
        %v395 = vld [vmem:[%s300 + $0x14] sm:$0xf]
        %vm396 = vcmask 519168
        %397 = vst.msk [vmem:[#allocation2 + $0x8] sm:$0xf] %vm396, %v390
        %398 = vst.msk [vmem:[#allocation2 + $0x14] sm:$0xf] %vm396, %v391
        %399 = vst.msk [vmem:[#allocation2 + $0x20] sm:$0xf] %vm396, %v392
        %400 = vst.msk [vmem:[#allocation2 + $0x2c] sm:$0xf] %vm396, %v393
        %401 = vst.msk [vmem:[#allocation2 + $0x38] sm:$0xf] %vm396, %v394
        %402 = vst.msk [vmem:[#allocation2 + $0x44] sm:$0xf] %vm396, %v395
        %vm403 = vcmask 781824
        %404 = vst.msk [vmem:[#allocation2 + $0x8] sm:$0xf] %vm403, 0
        %405 = vst.msk [vmem:[#allocation2 + $0x14] sm:$0xf] %vm403, 0
        %406 = vst.msk [vmem:[#allocation2 + $0x20] sm:$0xf] %vm403, 0
        %407 = vst.msk [vmem:[#allocation2 + $0x2c] sm:$0xf] %vm403, 0
        %408 = vst.msk [vmem:[#allocation2 + $0x38] sm:$0xf] %vm403, 0
        %409 = vst.msk [vmem:[#allocation2 + $0x44] sm:$0xf] %vm403, 0
        %v410 = vld [vmem:[#allocation2] sm:$0xff]
        %v411 = vld [vmem:[#allocation2 + $0xc] sm:$0xff]
        %v412 = vld [vmem:[#allocation2 + $0x18] sm:$0xff]
        %v413 = vld [vmem:[#allocation2 + $0x24] sm:$0xff]
        %v414 = vld [vmem:[#allocation2 + $0x30] sm:$0xff]
        %v415 = vld [vmem:[#allocation2 + $0x3c] sm:$0xff]
        %v416 = vld [vmem:[#allocation2 + $0x8] sm:$0xf]
        %v417 = vld [vmem:[#allocation2 + $0x14] sm:$0xf]
        %v418 = vld [vmem:[#allocation2 + $0x20] sm:$0xf]
        %v419 = vld [vmem:[#allocation2 + $0x2c] sm:$0xf]
        %v420 = vld [vmem:[#allocation2 + $0x38] sm:$0xf]
        %v421 = vld [vmem:[#allocation2 + $0x44] sm:$0xf]
        %v425 = vunpack.c.l.b16 %v353
        %v426 = vunpack.c.l.b16 %v354
        %v427 = vunpack.c.l.b16 %v355
        %v428 = vpack.c.b16 %v426, %v425
        %v429 = vpack.c.b16 %v427, %v427
        %v442 = vunpack.c.l.b16 %v410
        %v443 = vunpack.c.h.b16 %v410
        %v444 = vunpack.c.l.b16 %v416
        %v445 = vunpack.c.l.b16 %v411
        %v446 = vunpack.c.h.b16 %v411
        %v447 = vunpack.c.l.b16 %v417
        %v448 = vunpack.c.l.b16 %v412
        %v449 = vunpack.c.h.b16 %v412
        %v450 = vunpack.c.l.b16 %v418
        %v451 = vunpack.c.l.b16 %v413
        %v452 = vunpack.c.h.b16 %v413
        %v453 = vunpack.c.l.b16 %v419
        %v454 = vunpack.c.l.b16 %v414
        %v455 = vunpack.c.h.b16 %v414
        %v456 = vunpack.c.l.b16 %v420
        %v457 = vunpack.c.l.b16 %v415
        %v458 = vunpack.c.h.b16 %v415
        %v459 = vunpack.c.l.b16 %v421
        %v460 = vpack.c.b16 %v445, %v442
        %v461 = vpack.c.b16 %v446, %v443
        %v462 = vpack.c.b16 %v447, %v444
        %v463 = vpack.c.b16 %v451, %v448
        %v464 = vpack.c.b16 %v452, %v449
        %v465 = vpack.c.b16 %v453, %v450
        %v466 = vpack.c.b16 %v457, %v454
        %v467 = vpack.c.b16 %v458, %v455
        %v468 = vpack.c.b16 %v459, %v456
        %469 = vrot.lane.b32.xlu0 %v460, 127
        %v470 = vpop.permute.xlu0 %469
        %471 = vrot.lane.b32.xlu0 %v461, 127
        %v472 = vpop.permute.xlu0 %471
        %473 = vrot.lane.b32.xlu0 %v462, 127
        %v474 = vpop.permute.xlu0 %473
        %475 = vrot.lane.b32.xlu0 %v463, 127
        %v476 = vpop.permute.xlu0 %475
        %477 = vrot.lane.b32.xlu0 %v464, 127
        %v478 = vpop.permute.xlu0 %477
        %479 = vrot.lane.b32.xlu0 %v465, 127
        %v480 = vpop.permute.xlu0 %479
        %481 = vrot.lane.b32.xlu0 %v466, 127
        %v482 = vpop.permute.xlu0 %481
        %483 = vrot.lane.b32.xlu0 %v467, 127
        %v484 = vpop.permute.xlu0 %483
        %485 = vrot.lane.b32.xlu0 %v468, 127
        %v486 = vpop.permute.xlu0 %485
        %vm487 = vcmask 1039360
        %v488 = vsel %vm487, %v470, %v472
        %v489 = vsel %vm487, %v472, %v474
        %v490 = vsel %vm487, %v476, %v478
        %v491 = vsel %vm487, %v478, %v480
        %v492 = vsel %vm487, %v482, %v484
        %v493 = vsel %vm487, %v484, %v486
        %vm500 = vcmask 392192
        %v502 = vsel %vm500, %v428, 0
        %v505 = vsel %vm500, %v429, 0
        %507 = vmatpush.bf16.msra.mxu0 0
        %508 = vmatpush.bf16.msra.mxu0 0
        %509 = vmatpush.bf16.msra.mxu0 0
        %510 = vmatpush.bf16.msra.mxu0 0
        %511 = vmatpush.bf16.msra.mxu0 0
        %512 = vmatpush.bf16.msra.mxu0 %v492
        %513 = vmatpush.bf16.msra.mxu0 %v490
        %514 = vmatpush.bf16.msra.mxu0 %v488
        %515 = vmatmul.bf16.gmra.mxu0 %v502
        %v516 = vpop.f32.mrf.mxu0
        %v517 = vadd.f32 0.0, %v516
        %v518 = vpop.f32.mrf.mxu0
        %v519 = vadd.f32 0.0, %v518
        %520 = vmatmul.bf16.gmra.mxu0 %v505
        %v521 = vpop.f32.mrf.mxu0
        %v522 = vadd.f32 0.0, %v521
        %v523 = vpop.f32.mrf.mxu0
        %524 = vdwg.mxu0
        %525 = vmatpush.bf16.msra.mxu0 0
        %526 = vmatpush.bf16.msra.mxu0 0
        %527 = vmatpush.bf16.msra.mxu0 0
        %528 = vmatpush.bf16.msra.mxu0 0
        %529 = vmatpush.bf16.msra.mxu0 0
        %530 = vmatpush.bf16.msra.mxu0 %v493
        %531 = vmatpush.bf16.msra.mxu0 %v491
        %532 = vmatpush.bf16.msra.mxu0 %v489
        %533 = vmatmul.bf16.gmra.mxu0 %v502
        %v534 = vpop.f32.mrf.mxu0
        %v535 = vadd.f32 0.0, %v534
        %v536 = vpop.f32.mrf.mxu0
        %v537 = vadd.f32 0.0, %v536
        %538 = vmatmul.bf16.gmra.mxu0 %v505
        %v539 = vpop.f32.mrf.mxu0
        %v540 = vadd.f32 0.0, %v539
        %v541 = vpop.f32.mrf.mxu0
        %542 = vdwg.mxu0
        %v546 = vunpack.c.l.b16 %v350
        %v547 = vunpack.c.l.b16 %v351
        %v548 = vunpack.c.l.b16 %v352
        %v549 = vpack.c.b16 %v547, %v546
        %v550 = vpack.c.b16 %v548, %v548
        %v558 = vsel %vm500, %v549, 0
        %v561 = vsel %vm500, %v550, 0
        %563 = vmatpush.bf16.msra.mxu0 0
        %564 = vmatpush.bf16.msra.mxu0 0
        %565 = vmatpush.bf16.msra.mxu0 0
        %566 = vmatpush.bf16.msra.mxu0 0
        %567 = vmatpush.bf16.msra.mxu0 0
        %568 = vmatpush.bf16.msra.mxu0 %v466
        %569 = vmatpush.bf16.msra.mxu0 %v463
        %570 = vmatpush.bf16.msra.mxu0 %v460
        %571 = vmatmul.bf16.gmra.mxu0 %v558
        %v572 = vpop.f32.mrf.mxu0
        %v573 = vadd.f32 %v517, %v572
        %v574 = vpop.f32.mrf.mxu0
        %v575 = vadd.f32 %v519, %v574
        %576 = vmatmul.bf16.gmra.mxu0 %v561
        %v577 = vpop.f32.mrf.mxu0
        %v578 = vadd.f32 %v522, %v577
        %v579 = vpop.f32.mrf.mxu0
        %580 = vdwg.mxu0
        %581 = vmatpush.bf16.msra.mxu0 0
        %582 = vmatpush.bf16.msra.mxu0 0
        %583 = vmatpush.bf16.msra.mxu0 0
        %584 = vmatpush.bf16.msra.mxu0 0
        %585 = vmatpush.bf16.msra.mxu0 0
        %586 = vmatpush.bf16.msra.mxu0 %v467
        %587 = vmatpush.bf16.msra.mxu0 %v464
        %588 = vmatpush.bf16.msra.mxu0 %v461
        %589 = vmatmul.bf16.gmra.mxu0 %v558
        %v590 = vpop.f32.mrf.mxu0
        %v591 = vadd.f32 %v535, %v590
        %v592 = vpop.f32.mrf.mxu0
        %v593 = vadd.f32 %v537, %v592
        %594 = vmatmul.bf16.gmra.mxu0 %v561
        %v595 = vpop.f32.mrf.mxu0
        %v596 = vadd.f32 %v540, %v595
        %v597 = vpop.f32.mrf.mxu0
        %598 = vdwg.mxu0
        %v602 = vunpack.c.l.b16 %v356
        %v603 = vunpack.c.l.b16 %v357
        %v604 = vunpack.c.l.b16 %v358
        %v605 = vpack.c.b16 %v603, %v602
        %v606 = vpack.c.b16 %v604, %v604
        %607 = vrot.lane.b32.xlu0 %v460, 126
        %v608 = vpop.permute.xlu0 %607
        %609 = vrot.lane.b32.xlu0 %v461, 126
        %v610 = vpop.permute.xlu0 %609
        %611 = vrot.lane.b32.xlu0 %v462, 126
        %v612 = vpop.permute.xlu0 %611
        %613 = vrot.lane.b32.xlu0 %v463, 126
        %v614 = vpop.permute.xlu0 %613
        %615 = vrot.lane.b32.xlu0 %v464, 126
        %v616 = vpop.permute.xlu0 %615
        %617 = vrot.lane.b32.xlu0 %v465, 126
        %v618 = vpop.permute.xlu0 %617
        %619 = vrot.lane.b32.xlu0 %v466, 126
        %v620 = vpop.permute.xlu0 %619
        %621 = vrot.lane.b32.xlu0 %v467, 126
        %v622 = vpop.permute.xlu0 %621
        %623 = vrot.lane.b32.xlu0 %v468, 126
        %v624 = vpop.permute.xlu0 %623
        %vm625 = vcmask 1031168
        %v626 = vsel %vm625, %v608, %v610
        %v627 = vsel %vm625, %v610, %v612
        %v628 = vsel %vm625, %v614, %v616
        %v629 = vsel %vm625, %v616, %v618
        %v630 = vsel %vm625, %v620, %v622
        %v631 = vsel %vm625, %v622, %v624
        %v639 = vsel %vm500, %v605, 0
        %v642 = vsel %vm500, %v606, 0
        %644 = vmatpush.bf16.msra.mxu0 0
        %645 = vmatpush.bf16.msra.mxu0 0
        %646 = vmatpush.bf16.msra.mxu0 0
        %647 = vmatpush.bf16.msra.mxu0 0
        %648 = vmatpush.bf16.msra.mxu0 0
        %649 = vmatpush.bf16.msra.mxu0 %v630
        %650 = vmatpush.bf16.msra.mxu0 %v628
        %651 = vmatpush.bf16.msra.mxu0 %v626
        %652 = vmatmul.bf16.gmra.mxu0 %v639
        %v653 = vpop.f32.mrf.mxu0
        %v654 = vadd.f32 0.0, %v653
        %v655 = vpop.f32.mrf.mxu0
        %v656 = vadd.f32 0.0, %v655
        %657 = vmatmul.bf16.gmra.mxu0 %v642
        %v658 = vpop.f32.mrf.mxu0
        %v659 = vadd.f32 0.0, %v658
        %v660 = vpop.f32.mrf.mxu0
        %661 = vdwg.mxu0
        %662 = vmatpush.bf16.msra.mxu0 0
        %663 = vmatpush.bf16.msra.mxu0 0
        %664 = vmatpush.bf16.msra.mxu0 0
        %665 = vmatpush.bf16.msra.mxu0 0
        %666 = vmatpush.bf16.msra.mxu0 0
        %667 = vmatpush.bf16.msra.mxu0 %v631
        %668 = vmatpush.bf16.msra.mxu0 %v629
        %669 = vmatpush.bf16.msra.mxu0 %v627
        %670 = vmatmul.bf16.gmra.mxu0 %v639
        %v671 = vpop.f32.mrf.mxu0
        %v672 = vadd.f32 0.0, %v671
        %v673 = vpop.f32.mrf.mxu0
        %v674 = vadd.f32 0.0, %v673
        %675 = vmatmul.bf16.gmra.mxu0 %v642
        %v676 = vpop.f32.mrf.mxu0
        %v677 = vadd.f32 0.0, %v676
        %v678 = vpop.f32.mrf.mxu0
        %679 = vdwg.mxu0
        %v680 = vadd.f32 %v573, %v654
        %v681 = vadd.f32 %v591, %v672
        %v682 = vadd.f32 %v575, %v656
        %v683 = vadd.f32 %v593, %v674
        %v684 = vadd.f32 %v578, %v659
        %v685 = vadd.f32 %v596, %v677
        %v689 = vunpack.c.l.b16 %v359
        %v690 = vunpack.c.l.b16 %v360
        %v691 = vunpack.c.l.b16 %v361
        %v692 = vpack.c.b16 %v690, %v689
        %v693 = vpack.c.b16 %v691, %v691
        %694 = vrot.lane.b32.xlu0 %v460, 96
        %v695 = vpop.permute.xlu0 %694
        %696 = vrot.lane.b32.xlu0 %v461, 96
        %v697 = vpop.permute.xlu0 %696
        %698 = vrot.lane.b32.xlu0 %v462, 96
        %v699 = vpop.permute.xlu0 %698
        %700 = vrot.lane.b32.xlu0 %v463, 96
        %v701 = vpop.permute.xlu0 %700
        %702 = vrot.lane.b32.xlu0 %v464, 96
        %v703 = vpop.permute.xlu0 %702
        %704 = vrot.lane.b32.xlu0 %v465, 96
        %v705 = vpop.permute.xlu0 %704
        %706 = vrot.lane.b32.xlu0 %v466, 96
        %v707 = vpop.permute.xlu0 %706
        %708 = vrot.lane.b32.xlu0 %v467, 96
        %v709 = vpop.permute.xlu0 %708
        %710 = vrot.lane.b32.xlu0 %v468, 96
        %v711 = vpop.permute.xlu0 %710
        %vm712 = vcmask 785408
        %v713 = vsel %vm712, %v695, %v697
        %v714 = vsel %vm712, %v697, %v699
        %v715 = vsel %vm712, %v701, %v703
        %v716 = vsel %vm712, %v703, %v705
        %v717 = vsel %vm712, %v707, %v709
        %v718 = vsel %vm712, %v709, %v711
        %v726 = vsel %vm500, %v692, 0
        %v729 = vsel %vm500, %v693, 0
        %731 = vmatpush.bf16.msra.mxu0 0
        %732 = vmatpush.bf16.msra.mxu0 0
        %733 = vmatpush.bf16.msra.mxu0 0
        %734 = vmatpush.bf16.msra.mxu0 0
        %735 = vmatpush.bf16.msra.mxu0 0
        %736 = vmatpush.bf16.msra.mxu0 %v717
        %737 = vmatpush.bf16.msra.mxu0 %v715
        %738 = vmatpush.bf16.msra.mxu0 %v713
        %739 = vmatmul.bf16.gmra.mxu0 %v726
        %v740 = vpop.f32.mrf.mxu0
        %v741 = vadd.f32 0.0, %v740
        %v742 = vpop.f32.mrf.mxu0
        %v743 = vadd.f32 0.0, %v742
        %744 = vmatmul.bf16.gmra.mxu0 %v729
        %v745 = vpop.f32.mrf.mxu0
        %v746 = vadd.f32 0.0, %v745
        %v747 = vpop.f32.mrf.mxu0
        %748 = vdwg.mxu0
        %749 = vmatpush.bf16.msra.mxu0 0
        %750 = vmatpush.bf16.msra.mxu0 0
        %751 = vmatpush.bf16.msra.mxu0 0
        %752 = vmatpush.bf16.msra.mxu0 0
        %753 = vmatpush.bf16.msra.mxu0 0
        %754 = vmatpush.bf16.msra.mxu0 %v718
        %755 = vmatpush.bf16.msra.mxu0 %v716
        %756 = vmatpush.bf16.msra.mxu0 %v714
        %757 = vmatmul.bf16.gmra.mxu0 %v726
        %v758 = vpop.f32.mrf.mxu0
        %v759 = vadd.f32 0.0, %v758
        %v760 = vpop.f32.mrf.mxu0
        %v761 = vadd.f32 0.0, %v760
        %762 = vmatmul.bf16.gmra.mxu0 %v729
        %v763 = vpop.f32.mrf.mxu0
        %v764 = vadd.f32 0.0, %v763
        %v765 = vpop.f32.mrf.mxu0
        %766 = vdwg.mxu0
        %v767 = vadd.f32 %v680, %v741
        %v768 = vadd.f32 %v681, %v759
        %v769 = vadd.f32 %v682, %v743
        %v770 = vadd.f32 %v683, %v761
        %v771 = vadd.f32 %v684, %v746
        %v772 = vadd.f32 %v685, %v764
        %v776 = vunpack.c.l.b16 %v362
        %v777 = vunpack.c.l.b16 %v363
        %v778 = vunpack.c.l.b16 %v364
        %v779 = vpack.c.b16 %v777, %v776
        %v780 = vpack.c.b16 %v778, %v778
        %781 = vrot.lane.b32.xlu0 %v460, 95
        %v782 = vpop.permute.xlu0 %781
        %783 = vrot.lane.b32.xlu0 %v461, 95
        %v784 = vpop.permute.xlu0 %783
        %785 = vrot.lane.b32.xlu0 %v462, 95
        %v786 = vpop.permute.xlu0 %785
        %787 = vrot.lane.b32.xlu0 %v463, 95
        %v788 = vpop.permute.xlu0 %787
        %789 = vrot.lane.b32.xlu0 %v464, 95
        %v790 = vpop.permute.xlu0 %789
        %791 = vrot.lane.b32.xlu0 %v465, 95
        %v792 = vpop.permute.xlu0 %791
        %793 = vrot.lane.b32.xlu0 %v466, 95
        %v794 = vpop.permute.xlu0 %793
        %795 = vrot.lane.b32.xlu0 %v467, 95
        %v796 = vpop.permute.xlu0 %795
        %797 = vrot.lane.b32.xlu0 %v468, 95
        %v798 = vpop.permute.xlu0 %797
        %vm799 = vcmask 777216
        %v800 = vsel %vm799, %v782, %v784
        %v801 = vsel %vm799, %v784, %v786
        %v802 = vsel %vm799, %v788, %v790
        %v803 = vsel %vm799, %v790, %v792
        %v804 = vsel %vm799, %v794, %v796
        %v805 = vsel %vm799, %v796, %v798
        %v813 = vsel %vm500, %v779, 0
        %v816 = vsel %vm500, %v780, 0
        %818 = vmatpush.bf16.msra.mxu0 0
        %819 = vmatpush.bf16.msra.mxu0 0
        %820 = vmatpush.bf16.msra.mxu0 0
        %821 = vmatpush.bf16.msra.mxu0 0
        %822 = vmatpush.bf16.msra.mxu0 0
        %823 = vmatpush.bf16.msra.mxu0 %v804
        %824 = vmatpush.bf16.msra.mxu0 %v802
        %825 = vmatpush.bf16.msra.mxu0 %v800
        %826 = vmatmul.bf16.gmra.mxu0 %v813
        %v827 = vpop.f32.mrf.mxu0
        %v828 = vadd.f32 0.0, %v827
        %v829 = vpop.f32.mrf.mxu0
        %v830 = vadd.f32 0.0, %v829
        %831 = vmatmul.bf16.gmra.mxu0 %v816
        %v832 = vpop.f32.mrf.mxu0
        %v833 = vadd.f32 0.0, %v832
        %v834 = vpop.f32.mrf.mxu0
        %835 = vdwg.mxu0
        %836 = vmatpush.bf16.msra.mxu0 0
        %837 = vmatpush.bf16.msra.mxu0 0
        %838 = vmatpush.bf16.msra.mxu0 0
        %839 = vmatpush.bf16.msra.mxu0 0
        %840 = vmatpush.bf16.msra.mxu0 0
        %841 = vmatpush.bf16.msra.mxu0 %v805
        %842 = vmatpush.bf16.msra.mxu0 %v803
        %843 = vmatpush.bf16.msra.mxu0 %v801
        %844 = vmatmul.bf16.gmra.mxu0 %v813
        %v845 = vpop.f32.mrf.mxu0
        %v846 = vadd.f32 0.0, %v845
        %v847 = vpop.f32.mrf.mxu0
        %v848 = vadd.f32 0.0, %v847
        %849 = vmatmul.bf16.gmra.mxu0 %v816
        %v850 = vpop.f32.mrf.mxu0
        %v851 = vadd.f32 0.0, %v850
        %v852 = vpop.f32.mrf.mxu0
        %853 = vdwg.mxu0
        %v854 = vadd.f32 %v767, %v828
        %v855 = vadd.f32 %v768, %v846
        %v856 = vadd.f32 %v769, %v830
        %v857 = vadd.f32 %v770, %v848
        %v858 = vadd.f32 %v771, %v833
        %v859 = vadd.f32 %v772, %v851
        %v863 = vunpack.c.l.b16 %v365
        %v864 = vunpack.c.l.b16 %v366
        %v865 = vunpack.c.l.b16 %v367
        %v866 = vpack.c.b16 %v864, %v863
        %v867 = vpack.c.b16 %v865, %v865
        %868 = vrot.lane.b32.xlu0 %v460, 94
        %v869 = vpop.permute.xlu0 %868
        %870 = vrot.lane.b32.xlu0 %v461, 94
        %v871 = vpop.permute.xlu0 %870
        %872 = vrot.lane.b32.xlu0 %v462, 94
        %v873 = vpop.permute.xlu0 %872
        %874 = vrot.lane.b32.xlu0 %v463, 94
        %v875 = vpop.permute.xlu0 %874
        %876 = vrot.lane.b32.xlu0 %v464, 94
        %v877 = vpop.permute.xlu0 %876
        %878 = vrot.lane.b32.xlu0 %v465, 94
        %v879 = vpop.permute.xlu0 %878
        %880 = vrot.lane.b32.xlu0 %v466, 94
        %v881 = vpop.permute.xlu0 %880
        %882 = vrot.lane.b32.xlu0 %v467, 94
        %v883 = vpop.permute.xlu0 %882
        %884 = vrot.lane.b32.xlu0 %v468, 94
        %v885 = vpop.permute.xlu0 %884
        %vm886 = vcmask 769024
        %v887 = vsel %vm886, %v869, %v871
        %v888 = vsel %vm886, %v871, %v873
        %v889 = vsel %vm886, %v875, %v877
        %v890 = vsel %vm886, %v877, %v879
        %v891 = vsel %vm886, %v881, %v883
        %v892 = vsel %vm886, %v883, %v885
        %v900 = vsel %vm500, %v866, 0
        %v903 = vsel %vm500, %v867, 0
        %905 = vmatpush.bf16.msra.mxu0 0
        %906 = vmatpush.bf16.msra.mxu0 0
        %907 = vmatpush.bf16.msra.mxu0 0
        %908 = vmatpush.bf16.msra.mxu0 0
        %909 = vmatpush.bf16.msra.mxu0 0
        %910 = vmatpush.bf16.msra.mxu0 %v891
        %911 = vmatpush.bf16.msra.mxu0 %v889
        %912 = vmatpush.bf16.msra.mxu0 %v887
        %913 = vmatmul.bf16.gmra.mxu0 %v900
        %v914 = vpop.f32.mrf.mxu0
        %v915 = vadd.f32 0.0, %v914
        %v916 = vpop.f32.mrf.mxu0
        %v917 = vadd.f32 0.0, %v916
        %918 = vmatmul.bf16.gmra.mxu0 %v903
        %v919 = vpop.f32.mrf.mxu0
        %v920 = vadd.f32 0.0, %v919
        %v921 = vpop.f32.mrf.mxu0
        %922 = vdwg.mxu0
        %923 = vmatpush.bf16.msra.mxu0 0
        %924 = vmatpush.bf16.msra.mxu0 0
        %925 = vmatpush.bf16.msra.mxu0 0
        %926 = vmatpush.bf16.msra.mxu0 0
        %927 = vmatpush.bf16.msra.mxu0 0
        %928 = vmatpush.bf16.msra.mxu0 %v892
        %929 = vmatpush.bf16.msra.mxu0 %v890
        %930 = vmatpush.bf16.msra.mxu0 %v888
        %931 = vmatmul.bf16.gmra.mxu0 %v900
        %v932 = vpop.f32.mrf.mxu0
        %v933 = vadd.f32 0.0, %v932
        %v934 = vpop.f32.mrf.mxu0
        %v935 = vadd.f32 0.0, %v934
        %936 = vmatmul.bf16.gmra.mxu0 %v903
        %v937 = vpop.f32.mrf.mxu0
        %v938 = vadd.f32 0.0, %v937
        %v939 = vpop.f32.mrf.mxu0
        %940 = vdwg.mxu0
        %v941 = vadd.f32 %v854, %v915
        %v942 = vadd.f32 %v855, %v933
        %v943 = vadd.f32 %v856, %v917
        %v944 = vadd.f32 %v857, %v935
        %v945 = vadd.f32 %v858, %v920
        %v946 = vadd.f32 %v859, %v938
        %v950 = vunpack.c.l.b16 %v368
        %v951 = vunpack.c.l.b16 %v369
        %v952 = vunpack.c.l.b16 %v370
        %v953 = vpack.c.b16 %v951, %v950
        %v954 = vpack.c.b16 %v952, %v952
        %955 = vrot.lane.b32.xlu0 %v460, 64
        %v956 = vpop.permute.xlu0 %955
        %957 = vrot.lane.b32.xlu0 %v461, 64
        %v958 = vpop.permute.xlu0 %957
        %959 = vrot.lane.b32.xlu0 %v462, 64
        %v960 = vpop.permute.xlu0 %959
        %961 = vrot.lane.b32.xlu0 %v463, 64
        %v962 = vpop.permute.xlu0 %961
        %963 = vrot.lane.b32.xlu0 %v464, 64
        %v964 = vpop.permute.xlu0 %963
        %965 = vrot.lane.b32.xlu0 %v465, 64
        %v966 = vpop.permute.xlu0 %965
        %967 = vrot.lane.b32.xlu0 %v466, 64
        %v968 = vpop.permute.xlu0 %967
        %969 = vrot.lane.b32.xlu0 %v467, 64
        %v970 = vpop.permute.xlu0 %969
        %971 = vrot.lane.b32.xlu0 %v468, 64
        %v972 = vpop.permute.xlu0 %971
        %vm973 = vcmask 523264
        %v974 = vsel %vm973, %v956, %v958
        %v975 = vsel %vm973, %v958, %v960
        %v976 = vsel %vm973, %v962, %v964
        %v977 = vsel %vm973, %v964, %v966
        %v978 = vsel %vm973, %v968, %v970
        %v979 = vsel %vm973, %v970, %v972
        %v987 = vsel %vm500, %v953, 0
        %v990 = vsel %vm500, %v954, 0
        %992 = vmatpush.bf16.msra.mxu0 0
        %993 = vmatpush.bf16.msra.mxu0 0
        %994 = vmatpush.bf16.msra.mxu0 0
        %995 = vmatpush.bf16.msra.mxu0 0
        %996 = vmatpush.bf16.msra.mxu0 0
        %997 = vmatpush.bf16.msra.mxu0 %v978
        %998 = vmatpush.bf16.msra.mxu0 %v976
        %999 = vmatpush.bf16.msra.mxu0 %v974
        %1000 = vmatmul.bf16.gmra.mxu0 %v987
        %v1001 = vpop.f32.mrf.mxu0
        %v1002 = vadd.f32 0.0, %v1001
        %v1003 = vpop.f32.mrf.mxu0
        %v1004 = vadd.f32 0.0, %v1003
        %1005 = vmatmul.bf16.gmra.mxu0 %v990
        %v1006 = vpop.f32.mrf.mxu0
        %v1007 = vadd.f32 0.0, %v1006
        %v1008 = vpop.f32.mrf.mxu0
        %1009 = vdwg.mxu0
        %1010 = vmatpush.bf16.msra.mxu0 0
        %1011 = vmatpush.bf16.msra.mxu0 0
        %1012 = vmatpush.bf16.msra.mxu0 0
        %1013 = vmatpush.bf16.msra.mxu0 0
        %1014 = vmatpush.bf16.msra.mxu0 0
        %1015 = vmatpush.bf16.msra.mxu0 %v979
        %1016 = vmatpush.bf16.msra.mxu0 %v977
        %1017 = vmatpush.bf16.msra.mxu0 %v975
        %1018 = vmatmul.bf16.gmra.mxu0 %v987
        %v1019 = vpop.f32.mrf.mxu0
        %v1020 = vadd.f32 0.0, %v1019
        %v1021 = vpop.f32.mrf.mxu0
        %v1022 = vadd.f32 0.0, %v1021
        %1023 = vmatmul.bf16.gmra.mxu0 %v990
        %v1024 = vpop.f32.mrf.mxu0
        %v1025 = vadd.f32 0.0, %v1024
        %v1026 = vpop.f32.mrf.mxu0
        %1027 = vdwg.mxu0
        %v1028 = vadd.f32 %v941, %v1002
        %v1029 = vadd.f32 %v942, %v1020
        %v1030 = vadd.f32 %v943, %v1004
        %v1031 = vadd.f32 %v944, %v1022
        %v1032 = vadd.f32 %v945, %v1007
        %v1033 = vadd.f32 %v946, %v1025
        %v1037 = vunpack.c.l.b16 %v371
        %v1038 = vunpack.c.l.b16 %v372
        %v1039 = vunpack.c.l.b16 %v373
        %v1040 = vpack.c.b16 %v1038, %v1037
        %v1041 = vpack.c.b16 %v1039, %v1039
        %1042 = vrot.lane.b32.xlu0 %v460, 63
        %v1043 = vpop.permute.xlu0 %1042
        %1044 = vrot.lane.b32.xlu0 %v461, 63
        %v1045 = vpop.permute.xlu0 %1044
        %1046 = vrot.lane.b32.xlu0 %v462, 63
        %v1047 = vpop.permute.xlu0 %1046
        %1048 = vrot.lane.b32.xlu0 %v463, 63
        %v1049 = vpop.permute.xlu0 %1048
        %1050 = vrot.lane.b32.xlu0 %v464, 63
        %v1051 = vpop.permute.xlu0 %1050
        %1052 = vrot.lane.b32.xlu0 %v465, 63
        %v1053 = vpop.permute.xlu0 %1052
        %1054 = vrot.lane.b32.xlu0 %v466, 63
        %v1055 = vpop.permute.xlu0 %1054
        %1056 = vrot.lane.b32.xlu0 %v467, 63
        %v1057 = vpop.permute.xlu0 %1056
        %1058 = vrot.lane.b32.xlu0 %v468, 63
        %v1059 = vpop.permute.xlu0 %1058
        %vm1060 = vcmask 515072
        %v1061 = vsel %vm1060, %v1043, %v1045
        %v1062 = vsel %vm1060, %v1045, %v1047
        %v1063 = vsel %vm1060, %v1049, %v1051
        %v1064 = vsel %vm1060, %v1051, %v1053
        %v1065 = vsel %vm1060, %v1055, %v1057
        %v1066 = vsel %vm1060, %v1057, %v1059
        %v1074 = vsel %vm500, %v1040, 0
        %v1077 = vsel %vm500, %v1041, 0
        %1079 = vmatpush.bf16.msra.mxu0 0
        %1080 = vmatpush.bf16.msra.mxu0 0
        %1081 = vmatpush.bf16.msra.mxu0 0
        %1082 = vmatpush.bf16.msra.mxu0 0
        %1083 = vmatpush.bf16.msra.mxu0 0
        %1084 = vmatpush.bf16.msra.mxu0 %v1065
        %1085 = vmatpush.bf16.msra.mxu0 %v1063
        %1086 = vmatpush.bf16.msra.mxu0 %v1061
        %1087 = vmatmul.bf16.gmra.mxu0 %v1074
        %v1088 = vpop.f32.mrf.mxu0
        %v1089 = vadd.f32 0.0, %v1088
        %v1090 = vpop.f32.mrf.mxu0
        %v1091 = vadd.f32 0.0, %v1090
        %1092 = vmatmul.bf16.gmra.mxu0 %v1077
        %v1093 = vpop.f32.mrf.mxu0
        %v1094 = vadd.f32 0.0, %v1093
        %v1095 = vpop.f32.mrf.mxu0
        %1096 = vdwg.mxu0
        %1097 = vmatpush.bf16.msra.mxu0 0
        %1098 = vmatpush.bf16.msra.mxu0 0
        %1099 = vmatpush.bf16.msra.mxu0 0
        %1100 = vmatpush.bf16.msra.mxu0 0
        %1101 = vmatpush.bf16.msra.mxu0 0
        %1102 = vmatpush.bf16.msra.mxu0 %v1066
        %1103 = vmatpush.bf16.msra.mxu0 %v1064
        %1104 = vmatpush.bf16.msra.mxu0 %v1062
        %1105 = vmatmul.bf16.gmra.mxu0 %v1074
        %v1106 = vpop.f32.mrf.mxu0
        %v1107 = vadd.f32 0.0, %v1106
        %v1108 = vpop.f32.mrf.mxu0
        %v1109 = vadd.f32 0.0, %v1108
        %1110 = vmatmul.bf16.gmra.mxu0 %v1077
        %v1111 = vpop.f32.mrf.mxu0
        %v1112 = vadd.f32 0.0, %v1111
        %v1113 = vpop.f32.mrf.mxu0
        %1114 = vdwg.mxu0
        %v1115 = vadd.f32 %v1028, %v1089
        %v1116 = vadd.f32 %v1029, %v1107
        %v1117 = vadd.f32 %v1030, %v1091
        %v1118 = vadd.f32 %v1031, %v1109
        %v1119 = vadd.f32 %v1032, %v1094
        %v1120 = vadd.f32 %v1033, %v1112
        %v1124 = vunpack.c.l.b16 %v374
        %v1125 = vunpack.c.l.b16 %v375
        %v1126 = vunpack.c.l.b16 %v376
        %v1127 = vpack.c.b16 %v1125, %v1124
        %v1128 = vpack.c.b16 %v1126, %v1126
        %1129 = vrot.lane.b32.xlu0 %v460, 62
        %v1130 = vpop.permute.xlu0 %1129
        %1131 = vrot.lane.b32.xlu0 %v461, 62
        %v1132 = vpop.permute.xlu0 %1131
        %1133 = vrot.lane.b32.xlu0 %v462, 62
        %v1134 = vpop.permute.xlu0 %1133
        %1135 = vrot.lane.b32.xlu0 %v463, 62
        %v1136 = vpop.permute.xlu0 %1135
        %1137 = vrot.lane.b32.xlu0 %v464, 62
        %v1138 = vpop.permute.xlu0 %1137
        %1139 = vrot.lane.b32.xlu0 %v465, 62
        %v1140 = vpop.permute.xlu0 %1139
        %1141 = vrot.lane.b32.xlu0 %v466, 62
        %v1142 = vpop.permute.xlu0 %1141
        %1143 = vrot.lane.b32.xlu0 %v467, 62
        %v1144 = vpop.permute.xlu0 %1143
        %1145 = vrot.lane.b32.xlu0 %v468, 62
        %v1146 = vpop.permute.xlu0 %1145
        %vm1147 = vcmask 506880
        %v1148 = vsel %vm1147, %v1130, %v1132
        %v1149 = vsel %vm1147, %v1132, %v1134
        %v1150 = vsel %vm1147, %v1136, %v1138
        %v1151 = vsel %vm1147, %v1138, %v1140
        %v1152 = vsel %vm1147, %v1142, %v1144
        %v1153 = vsel %vm1147, %v1144, %v1146
        %v1161 = vsel %vm500, %v1127, 0
        %v1164 = vsel %vm500, %v1128, 0
        %1166 = vmatpush.bf16.msra.mxu0 0
        %1167 = vmatpush.bf16.msra.mxu0 0
        %1168 = vmatpush.bf16.msra.mxu0 0
        %1169 = vmatpush.bf16.msra.mxu0 0
        %1170 = vmatpush.bf16.msra.mxu0 0
        %1171 = vmatpush.bf16.msra.mxu0 %v1152
        %1172 = vmatpush.bf16.msra.mxu0 %v1150
        %1173 = vmatpush.bf16.msra.mxu0 %v1148
        %1174 = vmatmul.bf16.gmra.mxu0 %v1161
        %v1175 = vpop.f32.mrf.mxu0
        %v1176 = vadd.f32 0.0, %v1175
        %v1177 = vpop.f32.mrf.mxu0
        %v1178 = vadd.f32 0.0, %v1177
        %1179 = vmatmul.bf16.gmra.mxu0 %v1164
        %v1180 = vpop.f32.mrf.mxu0
        %v1181 = vadd.f32 0.0, %v1180
        %v1182 = vpop.f32.mrf.mxu0
        %1183 = vdwg.mxu0
        %1184 = vmatpush.bf16.msra.mxu0 0
        %1185 = vmatpush.bf16.msra.mxu0 0
        %1186 = vmatpush.bf16.msra.mxu0 0
        %1187 = vmatpush.bf16.msra.mxu0 0
        %1188 = vmatpush.bf16.msra.mxu0 0
        %1189 = vmatpush.bf16.msra.mxu0 %v1153
        %1190 = vmatpush.bf16.msra.mxu0 %v1151
        %1191 = vmatpush.bf16.msra.mxu0 %v1149
        %1192 = vmatmul.bf16.gmra.mxu0 %v1161
        %v1193 = vpop.f32.mrf.mxu0
        %v1194 = vadd.f32 0.0, %v1193
        %v1195 = vpop.f32.mrf.mxu0
        %v1196 = vadd.f32 0.0, %v1195
        %1197 = vmatmul.bf16.gmra.mxu0 %v1164
        %v1198 = vpop.f32.mrf.mxu0
        %v1199 = vadd.f32 0.0, %v1198
        %v1200 = vpop.f32.mrf.mxu0
        %1201 = vdwg.mxu0
        %v1202 = vadd.f32 %v1115, %v1176
        %v1203 = vadd.f32 %v1116, %v1194
        %v1204 = vadd.f32 %v1117, %v1178
        %v1205 = vadd.f32 %v1118, %v1196
        %v1206 = vadd.f32 %v1119, %v1181
        %v1207 = vadd.f32 %v1120, %v1199
        %1208 = vst [vmem:[%s334] sm:$0xff] %v1202
        %1209 = vst [vmem:[%s334 + $0x8] sm:$0xff] %v1203
        %1210 = vst [vmem:[%s334 + $0x10] sm:$0xf] %v1204
        %1211 = vst [vmem:[%s334 + $0x18] sm:$0xf] %v1205
        %1213 = vset.pattern.permute.xlu0 0
        %1214 = vperm.xlu0 %1213, %v377
        %v1215 = vpop.permute.xlu0 %1214
        %v1216 = vrot.slane %v1215, 4
        %v1218 = vadd.f32 %v1204, %v1216
        %v1219 = vadd.f32 %v1205, %v1216
        %v1220 = vadd.f32 %v1206, %v1216
        %v1221 = vadd.f32 %v1207, %v1216
        %vm1222 = vcmp.ge.f32.partialorder %v1218, 0.0
        %vm1223 = vcmp.ge.f32.partialorder %v1219, 0.0
        %vm1224 = vcmp.ge.f32.partialorder %v1220, 0.0
        %vm1225 = vcmp.ge.f32.partialorder %v1221, 0.0
        %v1226 = vmul.f32 %v1218, 0.2
        %v1227 = vmul.f32 %v1219, 0.2
        %v1228 = vmul.f32 %v1220, 0.2
        %v1229 = vmul.f32 %v1221, 0.2
        %v1230 = vsel %vm1222, %v1218, %v1226
        %v1231 = vsel %vm1223, %v1219, %v1227
        %v1232 = vsel %vm1224, %v1220, %v1228
        %v1233 = vsel %vm1225, %v1221, %v1229
        %v1234 = vmul.f32 %v1230, 1.4142135
        %v1235 = vmul.f32 %v1231, 1.4142135
        %v1236 = vmul.f32 %v1232, 1.4142135
        %v1237 = vmul.f32 %v1233, 1.4142135
        %vm1242 = vcmask 1043456
        %v1243 = vrot.slane %v1234, 4
        %v1244 = vrot.slane %v1236, 4
        %v1245 = vsel %vm1242, %v1243, %v1244
        %v1246 = vrot.slane %v1235, 4
        %v1247 = vrot.slane %v1237, 4
        %v1248 = vsel %vm1242, %v1246, %v1247
        %1251 = vst [vmem:[%s341] sm:$0xff] %v1245
        %1252 = vst [vmem:[%s341 + $0x8] sm:$0xff] %v1248
        %s1253 = sand.u32 %s146, 1
        %s1254 = sand.u32 %s146, 1
        %s1255 = smul.addr %s1254, 32
        %s1256 = scalar_lea.vmem [#allocation9], %s1255
        %s1257 = sand.u32 %s174, 1
        %s1258 = scalar_lea.sflag [#allocation5], %s1257
        %s1259 = sand.u32 %s174, 1
        %s1260 = smul.addr %s1259, 16
        %s1261 = scalar_lea.vmem [#allocation10], %s1260
        // Predicated region
        $region49: #{tpu_custom_call.1} parent=35 // pred_check
          %p1262 = pneg %p156
        $region50: #{tpu_custom_call.1} parent=35 // pred_check_branch
          %1264 = sbr.rel (%p1262) target = $region52
        $region51: #{tpu_custom_call.1} parent=35 // pred_region
          %s1265 = smul.u32 2, %s31
          %s1266 = smul.addr %s30, 8
          %s1267 = sadd.s32 %s1265, %s1266
          %s1268 = smul.addr %s1267, 8
          %s1269 = scalar_lea.vmem %s4, %s1268
          // Predicated region
          $region53: #{tpu_custom_call.1} parent=51 // pred_check
            _
          $region54: #{tpu_custom_call.1} parent=51 // pred_check_branch
            %1271 = sbr.rel (0) target = $region56
          $region55: #{tpu_custom_call.1} parent=51 // pred_region
            // Predicated region
            $region57: #{tpu_custom_call.1} parent=55 // pred_check
              _
            $region58: #{tpu_custom_call.1} parent=55 // pred_check_branch
              %1273 = sbr.rel (0) target = $region60
            $region59: #{tpu_custom_call.1} parent=55 // pred_region
              loop: start=0, step=1, limit=1
              $region61: #{tpu_custom_call.1} parent=59 // loop_pre_header
                _
              $region62: #{tpu_custom_call.1} parent=59 // loop_header
                %s1275 = sphi 0, %s1279
                %p1276 = scmp.ge.s32.totalorder %s1275, 1
                %s1280 = sphi %s1256, %s1256
                %s1281 = sphi %s1269, %s1269
              $region63: #{tpu_custom_call.1} parent=59 // loop_header_branch
                %1278 = sbr.rel (%p1276) target = $region67
              $region64: #{tpu_custom_call.1} parent=59 // loop_body
                %v1282 = vld [vmem:[%s1280] sm:$0xff]
                %1283 = vst [vmem:[%s1281] sm:$0xff] %v1282
                %v1284 = vld [vmem:[%s1280 + $0x8] sm:$0xff]
                %1285 = vst [vmem:[%s1281 + $0x8] sm:$0xff] %v1284
                %v1286 = vld [vmem:[%s1280 + $0x10] sm:$0xff]
                %1287 = vst [vmem:[%s1281 + $0x20] sm:$0xff] %v1286
                %v1288 = vld [vmem:[%s1280 + $0x18] sm:$0xff]
                %1289 = vst [vmem:[%s1281 + $0x28] sm:$0xff] %v1288
              $region65: #{tpu_custom_call.1} parent=59 // loop_footer
                %s1279 = sadd.s32 1, %s1275
              $region66: #{tpu_custom_call.1} parent=59 // loop_footer_branch
                %1274 = sbr.rel target = $region62
              $region67: #{tpu_custom_call.1} parent=59 // loop_exit
                _
            $region60: #{tpu_custom_call.1} parent=55 // pred_fallthru
              _
            // Predicated region
            $region68: #{tpu_custom_call.1} parent=55 // pred_check
              _
            $region69: #{tpu_custom_call.1} parent=55 // pred_check_branch
              %1291 = sbr.rel target = $region71
            $region70: #{tpu_custom_call.1} parent=55 // pred_region
              _
            $region71: #{tpu_custom_call.1} parent=55 // pred_fallthru
              _
          $region56: #{tpu_custom_call.1} parent=51 // pred_fallthru
            _
          %1292 = vnop
        $region52: #{tpu_custom_call.1} parent=35 // pred_fallthru
          _
        // Predicated region
        $region72: #{tpu_custom_call.1} parent=35 // pred_check
          %p1293 = pneg %p184
        $region73: #{tpu_custom_call.1} parent=35 // pred_check_branch
          %1295 = sbr.rel (%p1293) target = $region75
        $region74: #{tpu_custom_call.1} parent=35 // pred_region
          %s1296 = smul.u32 2, %s31
          %1298 = vsyncadd %s1258, 0
          %s1299 = smul.addr %s30, 4
          %s1300 = sadd.s32 %s1296, %s1299
          %s1301 = smul.addr %s1300, 8
          %s1302 = scalar_lea.hbm %s5, %s1301
          %s1304 = sshll.u32 %s1261, 4
          %s1305 = int_to_ptr.vmem [resolvable:$true] %s1304
          %s1306 = sshll.u32 %s1302, 4
          %s1307 = int_to_ptr.hbm [resolvable:$true] %s1306
          %1309 = dma.vmem_to_hbm [thread:$0]  %s1305, 256, %s1307, %s1258
        $region75: #{tpu_custom_call.1} parent=35 // pred_fallthru
          _
      $region36: #{tpu_custom_call.1} parent=5 // pred_fallthru
        _
      %p1310 = scmp.le.s32.totalorder 2, %s21
      // Predicated region
      $region76: #{tpu_custom_call.1} parent=5 // pred_check
        %p1311 = pneg %p1310
      $region77: #{tpu_custom_call.1} parent=5 // pred_check_branch
        %1313 = sbr.rel (%p1311) target = $region79
      $region78: #{tpu_custom_call.1} parent=5 // pred_region
        %s1314 = ssub.s32 %s21, 2
        // Predicated region
        $region80: #{tpu_custom_call.1} parent=78 // pred_check
          %p1315 = pneg %p162
        $region81: #{tpu_custom_call.1} parent=78 // pred_check_branch
          %1317 = sbr.rel (%p1315) target = $region83
        $region82: #{tpu_custom_call.1} parent=78 // pred_region
          %s1318 = sand.u32 %s147, 1
          %s1319 = sand.u32 %s147, 1
          %s1320 = smul.addr %s1319, 32
          %s1321 = scalar_lea.vmem [#allocation9], %s1320
        $region83: #{tpu_custom_call.1} parent=78 // pred_fallthru
          _
        // Predicated region
        $region84: #{tpu_custom_call.1} parent=78 // pred_check
          %p1322 = pneg %p190
        $region85: #{tpu_custom_call.1} parent=78 // pred_check_branch
          %1324 = sbr.rel (%p1322) target = $region87
        $region86: #{tpu_custom_call.1} parent=78 // pred_region
          %s1325 = sand.u32 %s175, 1
          %s1326 = scalar_lea.sflag [#allocation5], %s1325
          %s1327 = sand.u32 %s175, 1
          %s1328 = smul.addr %s1327, 16
          %s1329 = scalar_lea.vmem [#allocation10], %s1328
          %1331 = dma.done %s1326, 256
        $region87: #{tpu_custom_call.1} parent=78 // pred_fallthru
          _
      $region79: #{tpu_custom_call.1} parent=5 // pred_fallthru
        _
    $region6: #{tpu_custom_call.1} parent=1 // loop_footer
      %s25 = sadd.s32 1, %s21
    $region7: #{tpu_custom_call.1} parent=1 // loop_footer_branch
      %20 = sbr.rel target = $region3
    $region8: #{tpu_custom_call.1} parent=1 // loop_exit
      _
    %1332 = vsyncpa [#allocation4], 1
    %s1333 = scalar_lea.sflag [#allocation4], 1
    %1334 = vsyncpa %s1333, 1
    %1335 = vsyncpa [#allocation7], 1
    %s1336 = scalar_lea.sflag [#allocation7], 1
    %1337 = vsyncpa %s1336, 1
    %1338 = vsyncpa [#allocation5], 1
    %s1339 = scalar_lea.sflag [#allocation5], 1
    %1340 = vsyncpa %s1339, 1

</llo_original>
